<compile_context>
chip_gen: v7x
topology: tpu7x:2x2x1
jax: 0.10.0
libtpu: 0.0.40
codegen_flags: <defaults>
</compile_context>

<pallas_src>
import functools

import jax
import jax.numpy as jnp
from jax.experimental import pallas as pl
from jax.experimental.pallas import tpu as pltpu  # noqa: F401  (not required for this tiny, gridless kernel)


# ---------------------------------------------------------------------------
# helpers
# ---------------------------------------------------------------------------
def _full_spec(shape):
    """BlockSpec covering the whole array (no grid)."""
    return pl.BlockSpec(shape, lambda: (0,) * len(shape))


# ---------------------------------------------------------------------------
# Fused kernel: conv(+bias) -> maxpool -> ReLU  |  LSTM  |  fusion classifier
# ---------------------------------------------------------------------------
def _hybrid_kernel(pat_ref, wc_ref, bc_ref,            # CNN path
                   x_ref, wih_ref, whh_ref, bl_ref,    # LSTM path
                   w1c_ref, w1s_ref, b1_ref, w2_ref, b2_ref,  # fusion head
                   out_ref, *, B, F, T, HID):
    f32 = jnp.float32

    # ----- CNN path ---------------------------------------------------------
    # pat_ref: (B*4, C*9, S) decimated im2col patches, one slab per (batch, pool-phase).
    # conv output per slab is (F, S) -- F on sublanes, S=64 spatial positions on lanes.
    # MaxPool2d(2) == elementwise max over the 4 pool phases; ReLU after (equivalent to
    # ReLU-then-pool since both are monotone).
    wmat = wc_ref[...]                                  # (F, C*9)
    bias_c = bc_ref[...]                                # (F, 1) -> lane broadcast
    pooled = []
    for b in range(B):
        m = jnp.dot(wmat, pat_ref[4 * b], preferred_element_type=f32)
        for d in range(1, 4):
            m = jnp.maximum(m, jnp.dot(wmat, pat_ref[4 * b + d],
                                       preferred_element_type=f32))
        pooled.append(jnp.maximum(m + bias_c, 0.0))     # (F, S)

    # ----- LSTM path --------------------------------------------------------
    # Input projection hoisted out of the recurrence: one (T*B, Din) @ (Din, 4H) matmul,
    # bias added once.  Recurrence fully unrolled (T is a compile-time constant).
    xproj = jnp.dot(x_ref[...], wih_ref[...], preferred_element_type=f32) + bl_ref[...]
    whh = whh_ref[...]                                  # (HID, 4*HID)

    # Gate activation mask (PyTorch gate order i, f, g, o): tanh on the 'g' lanes,
    # sigmoid elsewhere -- applied full-width, no per-gate slicing before activation.
    lane = jax.lax.broadcasted_iota(jnp.int32, (B, 4 * HID), 1)
    is_g = jnp.logical_and(lane >= 2 * HID, lane < 3 * HID)

    h = jnp.zeros((B, HID), f32)
    c = jnp.zeros((B, HID), f32)
    for t in range(T):                                  # static unroll, T=8
        gates = xproj[t * B:(t + 1) * B, :] + jnp.dot(h, whh, preferred_element_type=f32)
        act = jnp.where(is_g, jnp.tanh(gates), jax.nn.sigmoid(gates))
        i_g = act[:, 0:HID]
        f_g = act[:, HID:2 * HID]
        g_g = act[:, 2 * HID:3 * HID]
        o_g = act[:, 3 * HID:4 * HID]
        c = f_g * c + i_g * g_g
        h = o_g * jnp.tanh(c)

    # ----- Fusion head ------------------------------------------------------
    # fc1 decomposed: seq block + per-conv-channel CNN blocks (no concat / flatten).
    h1 = jnp.dot(h, w1s_ref[...], preferred_element_type=f32) + b1_ref[...]   # (B, FUSION)
    for f in range(F):
        lhs = jnp.concatenate([pooled[b][f:f + 1, :] for b in range(B)], axis=0)  # (B, S)
        h1 = h1 + jnp.dot(lhs, w1c_ref[f], preferred_element_type=f32)
    h1 = jnp.maximum(h1, 0.0)
    # Dropout(0.5) is the identity in eval mode.
    out_ref[...] = jnp.dot(h1, w2_ref[...], preferred_element_type=f32) + b2_ref[...]


# ---------------------------------------------------------------------------
# HybridModel forward (single pallas_call; tiny wrapper-side input/weight prep)
# ---------------------------------------------------------------------------
@jax.jit
def hybrid_forward(params, cnn_input, seq_input):
    # cnn_input: (B, C, H, W) NCHW   seq_input: (B, T, Din)
    B, C, H, W = cnn_input.shape
    _, T, Din = seq_input.shape
    F = params["conv_w"].shape[0]
    HID = params["w_hh"].shape[1]
    FUSION = params["fc1_w"].shape[0]
    NC = params["fc2_w"].shape[0]
    Hp, Wp = H // 2, W // 2
    S = Hp * Wp

    # --- decimated im2col patches: one (C*9, S) slab per (batch, pool-phase) ---
    # Columns are the post-pool spatial positions (hp, wp); the 2x2 pooling phase
    # (dh, dw) selects which of the 4 conv-output pixels in each window the slab covers.
    xp = jnp.pad(cnn_input, ((0, 0), (0, 0), (1, 1), (1, 1)))          # (B, C, H+2, W+2)
    cols = [xp[:, :, kh:kh + H, kw:kw + W] for kh in range(3) for kw in range(3)]
    pat = jnp.stack(cols, axis=2)                                      # (B, C, 9, H, W)
    pat = pat.reshape(B, C, 9, Hp, 2, Wp, 2)
    pat = pat.transpose(0, 4, 6, 1, 2, 3, 5)                           # (B, dh, dw, C, 9, Hp, Wp)
    patches = pat.reshape(B * 4, C * 9, S).astype(jnp.float32)

    # --- weight re-layouts (constant-folded / trivial under jit) ---
    w_conv = params["conv_w"].reshape(F, C * 9)                        # (F, C*9)
    b_conv = params["conv_b"].reshape(F, 1)

    x2d = jnp.transpose(seq_input, (1, 0, 2)).reshape(T * B, Din)      # row = t*B + b
    w_ih_t = params["w_ih"].T                                          # (Din, 4H)
    w_hh_t = params["w_hh"].T                                          # (HID, 4H)
    b_lstm = (params["b_ih"] + params["b_hh"]).reshape(1, 4 * HID)

    # fc1 split: CNN part reshaped to (F, S, FUSION) matching the NCHW flatten order
    # (feature index = f*S + hp*Wp + wp); seq part is (HID, FUSION).
    w1cnn = params["fc1_w"][:, :F * S].T.reshape(F, S, FUSION)
    w1seq = params["fc1_w"][:, F * S:].T
    b1 = params["fc1_b"].reshape(1, FUSION)
    w2 = params["fc2_w"].T                                             # (FUSION, NC)
    b2 = params["fc2_b"].reshape(1, NC)

    operands = (patches, w_conv, b_conv, x2d, w_ih_t, w_hh_t, b_lstm,
                w1cnn, w1seq, b1, w2, b2)
    kernel = functools.partial(_hybrid_kernel, B=B, F=F, T=T, HID=HID)
    return pl.pallas_call(
        kernel,
        out_shape=jax.ShapeDtypeStruct((B, NC), jnp.float32),
        in_specs=[_full_spec(a.shape) for a in operands],
        out_specs=_full_spec((B, NC)),
    )(*operands)


# ---------------------------------------------------------------------------
# Pure-JAX reference (for a numerical sanity check)
# ---------------------------------------------------------------------------
def hybrid_forward_ref(params, cnn_input, seq_input):
    B, C, H, W = cnn_input.shape
    conv = jax.lax.conv_general_dilated(
        cnn_input, params["conv_w"], window_strides=(1, 1), padding="SAME",
        dimension_numbers=("NCHW", "OIHW", "NCHW"))
    conv = jnp.maximum(conv + params["conv_b"][None, :, None, None], 0.0)
    pooled = conv.reshape(B, conv.shape[1], H // 2, 2, W // 2, 2).max(axis=(3, 5))
    cnn_features = pooled.reshape(B, -1)

    Hh = params["w_hh"].shape[1]

    def step(carry, x_t):
        h, c = carry
        gates = x_t @ params["w_ih"].T + h @ params["w_hh"].T + params["b_ih"] + params["b_hh"]
        i = jax.nn.sigmoid(gates[:, 0:Hh])
        f = jax.nn.sigmoid(gates[:, Hh:2 * Hh])
        g = jnp.tanh(gates[:, 2 * Hh:3 * Hh])
        o = jax.nn.sigmoid(gates[:, 3 * Hh:4 * Hh])
        c_new = f * c + i * g
        h_new = o * jnp.tanh(c_new)
        return (h_new, c_new), None

    h0 = jnp.zeros((B, Hh), jnp.float32)
    (h_last, _), _ = jax.lax.scan(step, (h0, h0), jnp.transpose(seq_input, (1, 0, 2)))

    combined = jnp.concatenate([cnn_features, h_last], axis=1)
    h = jnp.maximum(combined @ params["fc1_w"].T + params["fc1_b"], 0.0)
    return h @ params["fc2_w"].T + params["fc2_b"]


# ---------------------------------------------------------------------------
# main
# ---------------------------------------------------------------------------
if __name__ == "__main__":
    key = jax.random.PRNGKey(0)
    ks = jax.random.split(key, 12)

    # Small shapes consistent with the module's forward.
    B, C, H, W = 2, 4, 16, 16            # CNN input (NCHW)
    T, DIN = 8, 6                        # sequence input (B, T, features)
    F = 8                                # conv output channels
    HID = 32                             # LSTM hidden size
    FUSION = 128                         # fusion hidden size
    NUM_CLASSES = 8

    scale = 0.05
    params = {
        "conv_w": scale * jax.random.normal(ks[0], (F, C, 3, 3), jnp.float32),
        "conv_b": scale * jax.random.normal(ks[1], (F,), jnp.float32),
        "w_ih": scale * jax.random.normal(ks[2], (4 * HID, DIN), jnp.float32),
        "w_hh": scale * jax.random.normal(ks[3], (4 * HID, HID), jnp.float32),
        "b_ih": scale * jax.random.normal(ks[4], (4 * HID,), jnp.float32),
        "b_hh": scale * jax.random.normal(ks[5], (4 * HID,), jnp.float32),
        "fc1_w": scale * jax.random.normal(ks[6], (FUSION, F * (H // 2) * (W // 2) + HID), jnp.float32),
        "fc1_b": scale * jax.random.normal(ks[7], (FUSION,), jnp.float32),
        "fc2_w": scale * jax.random.normal(ks[8], (NUM_CLASSES, FUSION), jnp.float32),
        "fc2_b": scale * jax.random.normal(ks[9], (NUM_CLASSES,), jnp.float32),
    }

    cnn_input = jax.random.normal(ks[10], (B, C, H, W), jnp.float32)
    seq_input = jax.random.normal(ks[11], (B, T, DIN), jnp.float32)

    out = hybrid_forward(params, cnn_input, seq_input)
    out = jax.block_until_ready(out)

    ref = jax.block_until_ready(hybrid_forward_ref(params, cnn_input, seq_input))

    assert out.shape == (B, NUM_CLASSES), out.shape
    assert bool(jnp.all(jnp.isfinite(out)))
    assert bool(jnp.allclose(out, ref, rtol=1e-2, atol=1e-2)), (out, ref)

    print("KERNEL_OK")
</pallas_src>

<mosaic_0001>
module attributes {stable_mosaic.version = 11 : i64} {
  func.func @_hybrid_kernel(%arg0: memref<8x36x64xf32, #tpu.memory_space<vmem>>, %arg1: memref<8x36xf32, #tpu.memory_space<vmem>>, %arg2: memref<8x1xf32, #tpu.memory_space<vmem>>, %arg3: memref<16x6xf32, #tpu.memory_space<vmem>>, %arg4: memref<6x128xf32, #tpu.memory_space<vmem>>, %arg5: memref<32x128xf32, #tpu.memory_space<vmem>>, %arg6: memref<1x128xf32, #tpu.memory_space<vmem>>, %arg7: memref<8x64x128xf32, #tpu.memory_space<vmem>>, %arg8: memref<32x128xf32, #tpu.memory_space<vmem>>, %arg9: memref<1x128xf32, #tpu.memory_space<vmem>>, %arg10: memref<128x8xf32, #tpu.memory_space<vmem>>, %arg11: memref<1x8xf32, #tpu.memory_space<vmem>>, %arg12: memref<2x8xf32, #tpu.memory_space<vmem>>) attributes {dimension_semantics = [], scalar_prefetch = 0 : i64, scratch_operands = 0 : i64, tpu.core_type = #tpu.core_type<tc>} {
    %c0 = arith.constant 0 : index
    %c0_0 = arith.constant 0 : index
    %0 = vector.load %arg1[%c0, %c0_0] : memref<8x36xf32, #tpu.memory_space<vmem>>, vector<8x36xf32>
    %c0_1 = arith.constant 0 : index
    %c0_2 = arith.constant 0 : index
    %1 = vector.load %arg2[%c0_1, %c0_2] : memref<8x1xf32, #tpu.memory_space<vmem>>, vector<8x1xf32>
    %c0_3 = arith.constant 0 : index
    %c0_4 = arith.constant 0 : index
    %c0_5 = arith.constant 0 : index
    %2 = vector.load %arg0[%c0_3, %c0_4, %c0_5] : memref<8x36x64xf32, #tpu.memory_space<vmem>>, vector<1x36x64xf32>
    %3 = vector.shape_cast %2 : vector<1x36x64xf32> to vector<36x64xf32>
    %cst = arith.constant dense<0.000000e+00> : vector<8x64xf32>
    %4 = tpu.matmul %0, %3, %cst {dimension_numbers = #tpu.dot_dimension_numbers<[1], [0], [0], [1], [0, 0, 1, 1], [], []>} : vector<8x36xf32>, vector<36x64xf32>, vector<8x64xf32> -> vector<8x64xf32>
    %c1 = arith.constant 1 : index
    %c0_6 = arith.constant 0 : index
    %c0_7 = arith.constant 0 : index
    %5 = vector.load %arg0[%c1, %c0_6, %c0_7] : memref<8x36x64xf32, #tpu.memory_space<vmem>>, vector<1x36x64xf32>
    %6 = vector.shape_cast %5 : vector<1x36x64xf32> to vector<36x64xf32>
    %cst_8 = arith.constant dense<0.000000e+00> : vector<8x64xf32>
    %7 = tpu.matmul %0, %6, %cst_8 {dimension_numbers = #tpu.dot_dimension_numbers<[1], [0], [0], [1], [0, 0, 1, 1], [], []>} : vector<8x36xf32>, vector<36x64xf32>, vector<8x64xf32> -> vector<8x64xf32>
    %8 = arith.maximumf %4, %7 : vector<8x64xf32>
    %c2 = arith.constant 2 : index
    %c0_9 = arith.constant 0 : index
    %c0_10 = arith.constant 0 : index
    %9 = vector.load %arg0[%c2, %c0_9, %c0_10] : memref<8x36x64xf32, #tpu.memory_space<vmem>>, vector<1x36x64xf32>
    %10 = vector.shape_cast %9 : vector<1x36x64xf32> to vector<36x64xf32>
    %cst_11 = arith.constant dense<0.000000e+00> : vector<8x64xf32>
    %11 = tpu.matmul %0, %10, %cst_11 {dimension_numbers = #tpu.dot_dimension_numbers<[1], [0], [0], [1], [0, 0, 1, 1], [], []>} : vector<8x36xf32>, vector<36x64xf32>, vector<8x64xf32> -> vector<8x64xf32>
    %12 = arith.maximumf %8, %11 : vector<8x64xf32>
    %c3 = arith.constant 3 : index
    %c0_12 = arith.constant 0 : index
    %c0_13 = arith.constant 0 : index
    %13 = vector.load %arg0[%c3, %c0_12, %c0_13] : memref<8x36x64xf32, #tpu.memory_space<vmem>>, vector<1x36x64xf32>
    %14 = vector.shape_cast %13 : vector<1x36x64xf32> to vector<36x64xf32>
    %cst_14 = arith.constant dense<0.000000e+00> : vector<8x64xf32>
    %15 = tpu.matmul %0, %14, %cst_14 {dimension_numbers = #tpu.dot_dimension_numbers<[1], [0], [0], [1], [0, 0, 1, 1], [], []>} : vector<8x36xf32>, vector<36x64xf32>, vector<8x64xf32> -> vector<8x64xf32>
    %16 = arith.maximumf %12, %15 : vector<8x64xf32>
    %17 = vector.broadcast %1 : vector<8x1xf32> to vector<8x64xf32>
    %18 = arith.addf %16, %17 : vector<8x64xf32>
    %cst_15 = arith.constant 0.000000e+00 : f32
    %19 = vector.broadcast %cst_15 : f32 to vector<8x64xf32>
    %20 = arith.maximumf %18, %19 : vector<8x64xf32>
    %c4 = arith.constant 4 : index
    %c0_16 = arith.constant 0 : index
    %c0_17 = arith.constant 0 : index
    %21 = vector.load %arg0[%c4, %c0_16, %c0_17] : memref<8x36x64xf32, #tpu.memory_space<vmem>>, vector<1x36x64xf32>
    %22 = vector.shape_cast %21 : vector<1x36x64xf32> to vector<36x64xf32>
    %cst_18 = arith.constant dense<0.000000e+00> : vector<8x64xf32>
    %23 = tpu.matmul %0, %22, %cst_18 {dimension_numbers = #tpu.dot_dimension_numbers<[1], [0], [0], [1], [0, 0, 1, 1], [], []>} : vector<8x36xf32>, vector<36x64xf32>, vector<8x64xf32> -> vector<8x64xf32>
    %c5 = arith.constant 5 : index
    %c0_19 = arith.constant 0 : index
    %c0_20 = arith.constant 0 : index
    %24 = vector.load %arg0[%c5, %c0_19, %c0_20] : memref<8x36x64xf32, #tpu.memory_space<vmem>>, vector<1x36x64xf32>
    %25 = vector.shape_cast %24 : vector<1x36x64xf32> to vector<36x64xf32>
    %cst_21 = arith.constant dense<0.000000e+00> : vector<8x64xf32>
    %26 = tpu.matmul %0, %25, %cst_21 {dimension_numbers = #tpu.dot_dimension_numbers<[1], [0], [0], [1], [0, 0, 1, 1], [], []>} : vector<8x36xf32>, vector<36x64xf32>, vector<8x64xf32> -> vector<8x64xf32>
    %27 = arith.maximumf %23, %26 : vector<8x64xf32>
    %c6 = arith.constant 6 : index
    %c0_22 = arith.constant 0 : index
    %c0_23 = arith.constant 0 : index
    %28 = vector.load %arg0[%c6, %c0_22, %c0_23] : memref<8x36x64xf32, #tpu.memory_space<vmem>>, vector<1x36x64xf32>
    %29 = vector.shape_cast %28 : vector<1x36x64xf32> to vector<36x64xf32>
    %cst_24 = arith.constant dense<0.000000e+00> : vector<8x64xf32>
    %30 = tpu.matmul %0, %29, %cst_24 {dimension_numbers = #tpu.dot_dimension_numbers<[1], [0], [0], [1], [0, 0, 1, 1], [], []>} : vector<8x36xf32>, vector<36x64xf32>, vector<8x64xf32> -> vector<8x64xf32>
    %31 = arith.maximumf %27, %30 : vector<8x64xf32>
    %c7 = arith.constant 7 : index
    %c0_25 = arith.constant 0 : index
    %c0_26 = arith.constant 0 : index
    %32 = vector.load %arg0[%c7, %c0_25, %c0_26] : memref<8x36x64xf32, #tpu.memory_space<vmem>>, vector<1x36x64xf32>
    %33 = vector.shape_cast %32 : vector<1x36x64xf32> to vector<36x64xf32>
    %cst_27 = arith.constant dense<0.000000e+00> : vector<8x64xf32>
    %34 = tpu.matmul %0, %33, %cst_27 {dimension_numbers = #tpu.dot_dimension_numbers<[1], [0], [0], [1], [0, 0, 1, 1], [], []>} : vector<8x36xf32>, vector<36x64xf32>, vector<8x64xf32> -> vector<8x64xf32>
    %35 = arith.maximumf %31, %34 : vector<8x64xf32>
    %36 = vector.broadcast %1 : vector<8x1xf32> to vector<8x64xf32>
    %37 = arith.addf %35, %36 : vector<8x64xf32>
    %cst_28 = arith.constant 0.000000e+00 : f32
    %38 = vector.broadcast %cst_28 : f32 to vector<8x64xf32>
    %39 = arith.maximumf %37, %38 : vector<8x64xf32>
    %c0_29 = arith.constant 0 : index
    %c0_30 = arith.constant 0 : index
    %40 = vector.load %arg3[%c0_29, %c0_30] : memref<16x6xf32, #tpu.memory_space<vmem>>, vector<16x6xf32>
    %c0_31 = arith.constant 0 : index
    %c0_32 = arith.constant 0 : index
    %41 = vector.load %arg4[%c0_31, %c0_32] : memref<6x128xf32, #tpu.memory_space<vmem>>, vector<6x128xf32>
    %cst_33 = arith.constant dense<0.000000e+00> : vector<16x128xf32>
    %42 = tpu.matmul %40, %41, %cst_33 {dimension_numbers = #tpu.dot_dimension_numbers<[1], [0], [0], [1], [0, 0, 1, 1], [], []>} : vector<16x6xf32>, vector<6x128xf32>, vector<16x128xf32> -> vector<16x128xf32>
    %c0_34 = arith.constant 0 : index
    %c0_35 = arith.constant 0 : index
    %43 = vector.load %arg6[%c0_34, %c0_35] : memref<1x128xf32, #tpu.memory_space<vmem>>, vector<1x128xf32>
    %44 = vector.broadcast %43 : vector<1x128xf32> to vector<16x128xf32>
    %45 = arith.addf %42, %44 : vector<16x128xf32>
    %c0_36 = arith.constant 0 : index
    %c0_37 = arith.constant 0 : index
    %46 = vector.load %arg5[%c0_36, %c0_37] : memref<32x128xf32, #tpu.memory_space<vmem>>, vector<32x128xf32>
    %47 = tpu.iota {dimensions = array<i32: 1>} : vector<2x128xi32>
    %c64_i32 = arith.constant 64 : i32
    %48 = vector.broadcast %c64_i32 : i32 to vector<2x128xi32>
    %49 = arith.cmpi sge, %47, %48 : vector<2x128xi32>
    %c96_i32 = arith.constant 96 : i32
    %50 = vector.broadcast %c96_i32 : i32 to vector<2x128xi32>
    %51 = arith.cmpi slt, %47, %50 : vector<2x128xi32>
    %52 = arith.andi %49, %51 : vector<2x128xi1>
    %cst_38 = arith.constant 0.000000e+00 : f32
    %53 = vector.broadcast %cst_38 : f32 to vector<2x32xf32>
    %cst_39 = arith.constant 0.000000e+00 : f32
    %54 = vector.broadcast %cst_39 : f32 to vector<2x32xf32>
    %55 = vector.extract_strided_slice %45 {offsets = [0, 0], sizes = [2, 128], strides = [1, 1]} : vector<16x128xf32> to vector<2x128xf32>
    %cst_40 = arith.constant dense<0.000000e+00> : vector<2x128xf32>
    %56 = tpu.matmul %53, %46, %cst_40 {dimension_numbers = #tpu.dot_dimension_numbers<[1], [0], [0], [1], [0, 0, 1, 1], [], []>} : vector<2x32xf32>, vector<32x128xf32>, vector<2x128xf32> -> vector<2x128xf32>
    %57 = arith.addf %55, %56 : vector<2x128xf32>
    %58 = math.tanh %57 : vector<2x128xf32>
    %59 = arith.negf %57 : vector<2x128xf32>
    %60 = math.exp %59 : vector<2x128xf32>
    %cst_41 = arith.constant 1.000000e+00 : f32
    %61 = vector.broadcast %cst_41 : f32 to vector<2x128xf32>
    %62 = arith.addf %61, %60 : vector<2x128xf32>
    %63 = arith.divf %61, %62 : vector<2x128xf32>
    %64 = arith.select %52, %58, %63 : vector<2x128xi1>, vector<2x128xf32>
    %65 = vector.extract_strided_slice %64 {offsets = [0, 0], sizes = [2, 32], strides = [1, 1]} : vector<2x128xf32> to vector<2x32xf32>
    %66 = vector.extract_strided_slice %64 {offsets = [0, 32], sizes = [2, 32], strides = [1, 1]} : vector<2x128xf32> to vector<2x32xf32>
    %67 = vector.extract_strided_slice %64 {offsets = [0, 64], sizes = [2, 32], strides = [1, 1]} : vector<2x128xf32> to vector<2x32xf32>
    %68 = vector.extract_strided_slice %64 {offsets = [0, 96], sizes = [2, 32], strides = [1, 1]} : vector<2x128xf32> to vector<2x32xf32>
    %69 = arith.mulf %66, %54 : vector<2x32xf32>
    %70 = arith.mulf %65, %67 : vector<2x32xf32>
    %71 = arith.addf %69, %70 : vector<2x32xf32>
    %72 = math.tanh %71 : vector<2x32xf32>
    %73 = arith.mulf %68, %72 : vector<2x32xf32>
    %74 = vector.extract_strided_slice %45 {offsets = [2, 0], sizes = [2, 128], strides = [1, 1]} : vector<16x128xf32> to vector<2x128xf32>
    %cst_42 = arith.constant dense<0.000000e+00> : vector<2x128xf32>
    %75 = tpu.matmul %73, %46, %cst_42 {dimension_numbers = #tpu.dot_dimension_numbers<[1], [0], [0], [1], [0, 0, 1, 1], [], []>} : vector<2x32xf32>, vector<32x128xf32>, vector<2x128xf32> -> vector<2x128xf32>
    %76 = arith.addf %74, %75 : vector<2x128xf32>
    %77 = math.tanh %76 : vector<2x128xf32>
    %78 = arith.negf %76 : vector<2x128xf32>
    %79 = math.exp %78 : vector<2x128xf32>
    %cst_43 = arith.constant 1.000000e+00 : f32
    %80 = vector.broadcast %cst_43 : f32 to vector<2x128xf32>
    %81 = arith.addf %80, %79 : vector<2x128xf32>
    %82 = arith.divf %80, %81 : vector<2x128xf32>
    %83 = arith.select %52, %77, %82 : vector<2x128xi1>, vector<2x128xf32>
    %84 = vector.extract_strided_slice %83 {offsets = [0, 0], sizes = [2, 32], strides = [1, 1]} : vector<2x128xf32> to vector<2x32xf32>
    %85 = vector.extract_strided_slice %83 {offsets = [0, 32], sizes = [2, 32], strides = [1, 1]} : vector<2x128xf32> to vector<2x32xf32>
    %86 = vector.extract_strided_slice %83 {offsets = [0, 64], sizes = [2, 32], strides = [1, 1]} : vector<2x128xf32> to vector<2x32xf32>
    %87 = vector.extract_strided_slice %83 {offsets = [0, 96], sizes = [2, 32], strides = [1, 1]} : vector<2x128xf32> to vector<2x32xf32>
    %88 = arith.mulf %85, %71 : vector<2x32xf32>
    %89 = arith.mulf %84, %86 : vector<2x32xf32>
    %90 = arith.addf %88, %89 : vector<2x32xf32>
    %91 = math.tanh %90 : vector<2x32xf32>
    %92 = arith.mulf %87, %91 : vector<2x32xf32>
    %93 = vector.extract_strided_slice %45 {offsets = [4, 0], sizes = [2, 128], strides = [1, 1]} : vector<16x128xf32> to vector<2x128xf32>
    %cst_44 = arith.constant dense<0.000000e+00> : vector<2x128xf32>
    %94 = tpu.matmul %92, %46, %cst_44 {dimension_numbers = #tpu.dot_dimension_numbers<[1], [0], [0], [1], [0, 0, 1, 1], [], []>} : vector<2x32xf32>, vector<32x128xf32>, vector<2x128xf32> -> vector<2x128xf32>
    %95 = arith.addf %93, %94 : vector<2x128xf32>
    %96 = math.tanh %95 : vector<2x128xf32>
    %97 = arith.negf %95 : vector<2x128xf32>
    %98 = math.exp %97 : vector<2x128xf32>
    %cst_45 = arith.constant 1.000000e+00 : f32
    %99 = vector.broadcast %cst_45 : f32 to vector<2x128xf32>
    %100 = arith.addf %99, %98 : vector<2x128xf32>
    %101 = arith.divf %99, %100 : vector<2x128xf32>
    %102 = arith.select %52, %96, %101 : vector<2x128xi1>, vector<2x128xf32>
    %103 = vector.extract_strided_slice %102 {offsets = [0, 0], sizes = [2, 32], strides = [1, 1]} : vector<2x128xf32> to vector<2x32xf32>
    %104 = vector.extract_strided_slice %102 {offsets = [0, 32], sizes = [2, 32], strides = [1, 1]} : vector<2x128xf32> to vector<2x32xf32>
    %105 = vector.extract_strided_slice %102 {offsets = [0, 64], sizes = [2, 32], strides = [1, 1]} : vector<2x128xf32> to vector<2x32xf32>
    %106 = vector.extract_strided_slice %102 {offsets = [0, 96], sizes = [2, 32], strides = [1, 1]} : vector<2x128xf32> to vector<2x32xf32>
    %107 = arith.mulf %104, %90 : vector<2x32xf32>
    %108 = arith.mulf %103, %105 : vector<2x32xf32>
    %109 = arith.addf %107, %108 : vector<2x32xf32>
    %110 = math.tanh %109 : vector<2x32xf32>
    %111 = arith.mulf %106, %110 : vector<2x32xf32>
    %112 = vector.extract_strided_slice %45 {offsets = [6, 0], sizes = [2, 128], strides = [1, 1]} : vector<16x128xf32> to vector<2x128xf32>
    %cst_46 = arith.constant dense<0.000000e+00> : vector<2x128xf32>
    %113 = tpu.matmul %111, %46, %cst_46 {dimension_numbers = #tpu.dot_dimension_numbers<[1], [0], [0], [1], [0, 0, 1, 1], [], []>} : vector<2x32xf32>, vector<32x128xf32>, vector<2x128xf32> -> vector<2x128xf32>
    %114 = arith.addf %112, %113 : vector<2x128xf32>
    %115 = math.tanh %114 : vector<2x128xf32>
    %116 = arith.negf %114 : vector<2x128xf32>
    %117 = math.exp %116 : vector<2x128xf32>
    %cst_47 = arith.constant 1.000000e+00 : f32
    %118 = vector.broadcast %cst_47 : f32 to vector<2x128xf32>
    %119 = arith.addf %118, %117 : vector<2x128xf32>
    %120 = arith.divf %118, %119 : vector<2x128xf32>
    %121 = arith.select %52, %115, %120 : vector<2x128xi1>, vector<2x128xf32>
    %122 = vector.extract_strided_slice %121 {offsets = [0, 0], sizes = [2, 32], strides = [1, 1]} : vector<2x128xf32> to vector<2x32xf32>
    %123 = vector.extract_strided_slice %121 {offsets = [0, 32], sizes = [2, 32], strides = [1, 1]} : vector<2x128xf32> to vector<2x32xf32>
    %124 = vector.extract_strided_slice %121 {offsets = [0, 64], sizes = [2, 32], strides = [1, 1]} : vector<2x128xf32> to vector<2x32xf32>
    %125 = vector.extract_strided_slice %121 {offsets = [0, 96], sizes = [2, 32], strides = [1, 1]} : vector<2x128xf32> to vector<2x32xf32>
    %126 = arith.mulf %123, %109 : vector<2x32xf32>
    %127 = arith.mulf %122, %124 : vector<2x32xf32>
    %128 = arith.addf %126, %127 : vector<2x32xf32>
    %129 = math.tanh %128 : vector<2x32xf32>
    %130 = arith.mulf %125, %129 : vector<2x32xf32>
    %131 = vector.extract_strided_slice %45 {offsets = [8, 0], sizes = [2, 128], strides = [1, 1]} : vector<16x128xf32> to vector<2x128xf32>
    %cst_48 = arith.constant dense<0.000000e+00> : vector<2x128xf32>
    %132 = tpu.matmul %130, %46, %cst_48 {dimension_numbers = #tpu.dot_dimension_numbers<[1], [0], [0], [1], [0, 0, 1, 1], [], []>} : vector<2x32xf32>, vector<32x128xf32>, vector<2x128xf32> -> vector<2x128xf32>
    %133 = arith.addf %131, %132 : vector<2x128xf32>
    %134 = math.tanh %133 : vector<2x128xf32>
    %135 = arith.negf %133 : vector<2x128xf32>
    %136 = math.exp %135 : vector<2x128xf32>
    %cst_49 = arith.constant 1.000000e+00 : f32
    %137 = vector.broadcast %cst_49 : f32 to vector<2x128xf32>
    %138 = arith.addf %137, %136 : vector<2x128xf32>
    %139 = arith.divf %137, %138 : vector<2x128xf32>
    %140 = arith.select %52, %134, %139 : vector<2x128xi1>, vector<2x128xf32>
    %141 = vector.extract_strided_slice %140 {offsets = [0, 0], sizes = [2, 32], strides = [1, 1]} : vector<2x128xf32> to vector<2x32xf32>
    %142 = vector.extract_strided_slice %140 {offsets = [0, 32], sizes = [2, 32], strides = [1, 1]} : vector<2x128xf32> to vector<2x32xf32>
    %143 = vector.extract_strided_slice %140 {offsets = [0, 64], sizes = [2, 32], strides = [1, 1]} : vector<2x128xf32> to vector<2x32xf32>
    %144 = vector.extract_strided_slice %140 {offsets = [0, 96], sizes = [2, 32], strides = [1, 1]} : vector<2x128xf32> to vector<2x32xf32>
    %145 = arith.mulf %142, %128 : vector<2x32xf32>
    %146 = arith.mulf %141, %143 : vector<2x32xf32>
    %147 = arith.addf %145, %146 : vector<2x32xf32>
    %148 = math.tanh %147 : vector<2x32xf32>
    %149 = arith.mulf %144, %148 : vector<2x32xf32>
    %150 = vector.extract_strided_slice %45 {offsets = [10, 0], sizes = [2, 128], strides = [1, 1]} : vector<16x128xf32> to vector<2x128xf32>
    %cst_50 = arith.constant dense<0.000000e+00> : vector<2x128xf32>
    %151 = tpu.matmul %149, %46, %cst_50 {dimension_numbers = #tpu.dot_dimension_numbers<[1], [0], [0], [1], [0, 0, 1, 1], [], []>} : vector<2x32xf32>, vector<32x128xf32>, vector<2x128xf32> -> vector<2x128xf32>
    %152 = arith.addf %150, %151 : vector<2x128xf32>
    %153 = math.tanh %152 : vector<2x128xf32>
    %154 = arith.negf %152 : vector<2x128xf32>
    %155 = math.exp %154 : vector<2x128xf32>
    %cst_51 = arith.constant 1.000000e+00 : f32
    %156 = vector.broadcast %cst_51 : f32 to vector<2x128xf32>
    %157 = arith.addf %156, %155 : vector<2x128xf32>
    %158 = arith.divf %156, %157 : vector<2x128xf32>
    %159 = arith.select %52, %153, %158 : vector<2x128xi1>, vector<2x128xf32>
    %160 = vector.extract_strided_slice %159 {offsets = [0, 0], sizes = [2, 32], strides = [1, 1]} : vector<2x128xf32> to vector<2x32xf32>
    %161 = vector.extract_strided_slice %159 {offsets = [0, 32], sizes = [2, 32], strides = [1, 1]} : vector<2x128xf32> to vector<2x32xf32>
    %162 = vector.extract_strided_slice %159 {offsets = [0, 64], sizes = [2, 32], strides = [1, 1]} : vector<2x128xf32> to vector<2x32xf32>
    %163 = vector.extract_strided_slice %159 {offsets = [0, 96], sizes = [2, 32], strides = [1, 1]} : vector<2x128xf32> to vector<2x32xf32>
    %164 = arith.mulf %161, %147 : vector<2x32xf32>
    %165 = arith.mulf %160, %162 : vector<2x32xf32>
    %166 = arith.addf %164, %165 : vector<2x32xf32>
    %167 = math.tanh %166 : vector<2x32xf32>
    %168 = arith.mulf %163, %167 : vector<2x32xf32>
    %169 = vector.extract_strided_slice %45 {offsets = [12, 0], sizes = [2, 128], strides = [1, 1]} : vector<16x128xf32> to vector<2x128xf32>
    %cst_52 = arith.constant dense<0.000000e+00> : vector<2x128xf32>
    %170 = tpu.matmul %168, %46, %cst_52 {dimension_numbers = #tpu.dot_dimension_numbers<[1], [0], [0], [1], [0, 0, 1, 1], [], []>} : vector<2x32xf32>, vector<32x128xf32>, vector<2x128xf32> -> vector<2x128xf32>
    %171 = arith.addf %169, %170 : vector<2x128xf32>
    %172 = math.tanh %171 : vector<2x128xf32>
    %173 = arith.negf %171 : vector<2x128xf32>
    %174 = math.exp %173 : vector<2x128xf32>
    %cst_53 = arith.constant 1.000000e+00 : f32
    %175 = vector.broadcast %cst_53 : f32 to vector<2x128xf32>
    %176 = arith.addf %175, %174 : vector<2x128xf32>
    %177 = arith.divf %175, %176 : vector<2x128xf32>
    %178 = arith.select %52, %172, %177 : vector<2x128xi1>, vector<2x128xf32>
    %179 = vector.extract_strided_slice %178 {offsets = [0, 0], sizes = [2, 32], strides = [1, 1]} : vector<2x128xf32> to vector<2x32xf32>
    %180 = vector.extract_strided_slice %178 {offsets = [0, 32], sizes = [2, 32], strides = [1, 1]} : vector<2x128xf32> to vector<2x32xf32>
    %181 = vector.extract_strided_slice %178 {offsets = [0, 64], sizes = [2, 32], strides = [1, 1]} : vector<2x128xf32> to vector<2x32xf32>
    %182 = vector.extract_strided_slice %178 {offsets = [0, 96], sizes = [2, 32], strides = [1, 1]} : vector<2x128xf32> to vector<2x32xf32>
    %183 = arith.mulf %180, %166 : vector<2x32xf32>
    %184 = arith.mulf %179, %181 : vector<2x32xf32>
    %185 = arith.addf %183, %184 : vector<2x32xf32>
    %186 = math.tanh %185 : vector<2x32xf32>
    %187 = arith.mulf %182, %186 : vector<2x32xf32>
    %188 = vector.extract_strided_slice %45 {offsets = [14, 0], sizes = [2, 128], strides = [1, 1]} : vector<16x128xf32> to vector<2x128xf32>
    %cst_54 = arith.constant dense<0.000000e+00> : vector<2x128xf32>
    %189 = tpu.matmul %187, %46, %cst_54 {dimension_numbers = #tpu.dot_dimension_numbers<[1], [0], [0], [1], [0, 0, 1, 1], [], []>} : vector<2x32xf32>, vector<32x128xf32>, vector<2x128xf32> -> vector<2x128xf32>
    %190 = arith.addf %188, %189 : vector<2x128xf32>
    %191 = math.tanh %190 : vector<2x128xf32>
    %192 = arith.negf %190 : vector<2x128xf32>
    %193 = math.exp %192 : vector<2x128xf32>
    %cst_55 = arith.constant 1.000000e+00 : f32
    %194 = vector.broadcast %cst_55 : f32 to vector<2x128xf32>
    %195 = arith.addf %194, %193 : vector<2x128xf32>
    %196 = arith.divf %194, %195 : vector<2x128xf32>
    %197 = arith.select %52, %191, %196 : vector<2x128xi1>, vector<2x128xf32>
    %198 = vector.extract_strided_slice %197 {offsets = [0, 0], sizes = [2, 32], strides = [1, 1]} : vector<2x128xf32> to vector<2x32xf32>
    %199 = vector.extract_strided_slice %197 {offsets = [0, 32], sizes = [2, 32], strides = [1, 1]} : vector<2x128xf32> to vector<2x32xf32>
    %200 = vector.extract_strided_slice %197 {offsets = [0, 64], sizes = [2, 32], strides = [1, 1]} : vector<2x128xf32> to vector<2x32xf32>
    %201 = vector.extract_strided_slice %197 {offsets = [0, 96], sizes = [2, 32], strides = [1, 1]} : vector<2x128xf32> to vector<2x32xf32>
    %202 = arith.mulf %199, %185 : vector<2x32xf32>
    %203 = arith.mulf %198, %200 : vector<2x32xf32>
    %204 = arith.addf %202, %203 : vector<2x32xf32>
    %205 = math.tanh %204 : vector<2x32xf32>
    %206 = arith.mulf %201, %205 : vector<2x32xf32>
    %c0_56 = arith.constant 0 : index
    %c0_57 = arith.constant 0 : index
    %207 = vector.load %arg8[%c0_56, %c0_57] : memref<32x128xf32, #tpu.memory_space<vmem>>, vector<32x128xf32>
    %cst_58 = arith.constant dense<0.000000e+00> : vector<2x128xf32>
    %208 = tpu.matmul %206, %207, %cst_58 {dimension_numbers = #tpu.dot_dimension_numbers<[1], [0], [0], [1], [0, 0, 1, 1], [], []>} : vector<2x32xf32>, vector<32x128xf32>, vector<2x128xf32> -> vector<2x128xf32>
    %c0_59 = arith.constant 0 : index
    %c0_60 = arith.constant 0 : index
    %209 = vector.load %arg9[%c0_59, %c0_60] : memref<1x128xf32, #tpu.memory_space<vmem>>, vector<1x128xf32>
    %210 = vector.broadcast %209 : vector<1x128xf32> to vector<2x128xf32>
    %211 = arith.addf %208, %210 : vector<2x128xf32>
    %212 = vector.extract_strided_slice %20 {offsets = [0, 0], sizes = [1, 64], strides = [1, 1]} : vector<8x64xf32> to vector<1x64xf32>
    %213 = vector.extract_strided_slice %39 {offsets = [0, 0], sizes = [1, 64], strides = [1, 1]} : vector<8x64xf32> to vector<1x64xf32>
    %214 = tpu.concatenate %212, %213 in 0 : vector<1x64xf32>, vector<1x64xf32> -> vector<2x64xf32>
    %c0_61 = arith.constant 0 : index
    %c0_62 = arith.constant 0 : index
    %c0_63 = arith.constant 0 : index
    %215 = vector.load %arg7[%c0_61, %c0_62, %c0_63] : memref<8x64x128xf32, #tpu.memory_space<vmem>>, vector<1x64x128xf32>
    %216 = vector.shape_cast %215 : vector<1x64x128xf32> to vector<64x128xf32>
    %cst_64 = arith.constant dense<0.000000e+00> : vector<2x128xf32>
    %217 = tpu.matmul %214, %216, %cst_64 {dimension_numbers = #tpu.dot_dimension_numbers<[1], [0], [0], [1], [0, 0, 1, 1], [], []>} : vector<2x64xf32>, vector<64x128xf32>, vector<2x128xf32> -> vector<2x128xf32>
    %218 = arith.addf %211, %217 : vector<2x128xf32>
    %219 = vector.extract_strided_slice %20 {offsets = [1, 0], sizes = [1, 64], strides = [1, 1]} : vector<8x64xf32> to vector<1x64xf32>
    %220 = vector.extract_strided_slice %39 {offsets = [1, 0], sizes = [1, 64], strides = [1, 1]} : vector<8x64xf32> to vector<1x64xf32>
    %221 = tpu.concatenate %219, %220 in 0 : vector<1x64xf32>, vector<1x64xf32> -> vector<2x64xf32>
    %c1_65 = arith.constant 1 : index
    %c0_66 = arith.constant 0 : index
    %c0_67 = arith.constant 0 : index
    %222 = vector.load %arg7[%c1_65, %c0_66, %c0_67] : memref<8x64x128xf32, #tpu.memory_space<vmem>>, vector<1x64x128xf32>
    %223 = vector.shape_cast %222 : vector<1x64x128xf32> to vector<64x128xf32>
    %cst_68 = arith.constant dense<0.000000e+00> : vector<2x128xf32>
    %224 = tpu.matmul %221, %223, %cst_68 {dimension_numbers = #tpu.dot_dimension_numbers<[1], [0], [0], [1], [0, 0, 1, 1], [], []>} : vector<2x64xf32>, vector<64x128xf32>, vector<2x128xf32> -> vector<2x128xf32>
    %225 = arith.addf %218, %224 : vector<2x128xf32>
    %226 = vector.extract_strided_slice %20 {offsets = [2, 0], sizes = [1, 64], strides = [1, 1]} : vector<8x64xf32> to vector<1x64xf32>
    %227 = vector.extract_strided_slice %39 {offsets = [2, 0], sizes = [1, 64], strides = [1, 1]} : vector<8x64xf32> to vector<1x64xf32>
    %228 = tpu.concatenate %226, %227 in 0 : vector<1x64xf32>, vector<1x64xf32> -> vector<2x64xf32>
    %c2_69 = arith.constant 2 : index
    %c0_70 = arith.constant 0 : index
    %c0_71 = arith.constant 0 : index
    %229 = vector.load %arg7[%c2_69, %c0_70, %c0_71] : memref<8x64x128xf32, #tpu.memory_space<vmem>>, vector<1x64x128xf32>
    %230 = vector.shape_cast %229 : vector<1x64x128xf32> to vector<64x128xf32>
    %cst_72 = arith.constant dense<0.000000e+00> : vector<2x128xf32>
    %231 = tpu.matmul %228, %230, %cst_72 {dimension_numbers = #tpu.dot_dimension_numbers<[1], [0], [0], [1], [0, 0, 1, 1], [], []>} : vector<2x64xf32>, vector<64x128xf32>, vector<2x128xf32> -> vector<2x128xf32>
    %232 = arith.addf %225, %231 : vector<2x128xf32>
    %233 = vector.extract_strided_slice %20 {offsets = [3, 0], sizes = [1, 64], strides = [1, 1]} : vector<8x64xf32> to vector<1x64xf32>
    %234 = vector.extract_strided_slice %39 {offsets = [3, 0], sizes = [1, 64], strides = [1, 1]} : vector<8x64xf32> to vector<1x64xf32>
    %235 = tpu.concatenate %233, %234 in 0 : vector<1x64xf32>, vector<1x64xf32> -> vector<2x64xf32>
    %c3_73 = arith.constant 3 : index
    %c0_74 = arith.constant 0 : index
    %c0_75 = arith.constant 0 : index
    %236 = vector.load %arg7[%c3_73, %c0_74, %c0_75] : memref<8x64x128xf32, #tpu.memory_space<vmem>>, vector<1x64x128xf32>
    %237 = vector.shape_cast %236 : vector<1x64x128xf32> to vector<64x128xf32>
    %cst_76 = arith.constant dense<0.000000e+00> : vector<2x128xf32>
    %238 = tpu.matmul %235, %237, %cst_76 {dimension_numbers = #tpu.dot_dimension_numbers<[1], [0], [0], [1], [0, 0, 1, 1], [], []>} : vector<2x64xf32>, vector<64x128xf32>, vector<2x128xf32> -> vector<2x128xf32>
    %239 = arith.addf %232, %238 : vector<2x128xf32>
    %240 = vector.extract_strided_slice %20 {offsets = [4, 0], sizes = [1, 64], strides = [1, 1]} : vector<8x64xf32> to vector<1x64xf32>
    %241 = vector.extract_strided_slice %39 {offsets = [4, 0], sizes = [1, 64], strides = [1, 1]} : vector<8x64xf32> to vector<1x64xf32>
    %242 = tpu.concatenate %240, %241 in 0 : vector<1x64xf32>, vector<1x64xf32> -> vector<2x64xf32>
    %c4_77 = arith.constant 4 : index
    %c0_78 = arith.constant 0 : index
    %c0_79 = arith.constant 0 : index
    %243 = vector.load %arg7[%c4_77, %c0_78, %c0_79] : memref<8x64x128xf32, #tpu.memory_space<vmem>>, vector<1x64x128xf32>
    %244 = vector.shape_cast %243 : vector<1x64x128xf32> to vector<64x128xf32>
    %cst_80 = arith.constant dense<0.000000e+00> : vector<2x128xf32>
    %245 = tpu.matmul %242, %244, %cst_80 {dimension_numbers = #tpu.dot_dimension_numbers<[1], [0], [0], [1], [0, 0, 1, 1], [], []>} : vector<2x64xf32>, vector<64x128xf32>, vector<2x128xf32> -> vector<2x128xf32>
    %246 = arith.addf %239, %245 : vector<2x128xf32>
    %247 = vector.extract_strided_slice %20 {offsets = [5, 0], sizes = [1, 64], strides = [1, 1]} : vector<8x64xf32> to vector<1x64xf32>
    %248 = vector.extract_strided_slice %39 {offsets = [5, 0], sizes = [1, 64], strides = [1, 1]} : vector<8x64xf32> to vector<1x64xf32>
    %249 = tpu.concatenate %247, %248 in 0 : vector<1x64xf32>, vector<1x64xf32> -> vector<2x64xf32>
    %c5_81 = arith.constant 5 : index
    %c0_82 = arith.constant 0 : index
    %c0_83 = arith.constant 0 : index
    %250 = vector.load %arg7[%c5_81, %c0_82, %c0_83] : memref<8x64x128xf32, #tpu.memory_space<vmem>>, vector<1x64x128xf32>
    %251 = vector.shape_cast %250 : vector<1x64x128xf32> to vector<64x128xf32>
    %cst_84 = arith.constant dense<0.000000e+00> : vector<2x128xf32>
    %252 = tpu.matmul %249, %251, %cst_84 {dimension_numbers = #tpu.dot_dimension_numbers<[1], [0], [0], [1], [0, 0, 1, 1], [], []>} : vector<2x64xf32>, vector<64x128xf32>, vector<2x128xf32> -> vector<2x128xf32>
    %253 = arith.addf %246, %252 : vector<2x128xf32>
    %254 = vector.extract_strided_slice %20 {offsets = [6, 0], sizes = [1, 64], strides = [1, 1]} : vector<8x64xf32> to vector<1x64xf32>
    %255 = vector.extract_strided_slice %39 {offsets = [6, 0], sizes = [1, 64], strides = [1, 1]} : vector<8x64xf32> to vector<1x64xf32>
    %256 = tpu.concatenate %254, %255 in 0 : vector<1x64xf32>, vector<1x64xf32> -> vector<2x64xf32>
    %c6_85 = arith.constant 6 : index
    %c0_86 = arith.constant 0 : index
    %c0_87 = arith.constant 0 : index
    %257 = vector.load %arg7[%c6_85, %c0_86, %c0_87] : memref<8x64x128xf32, #tpu.memory_space<vmem>>, vector<1x64x128xf32>
    %258 = vector.shape_cast %257 : vector<1x64x128xf32> to vector<64x128xf32>
    %cst_88 = arith.constant dense<0.000000e+00> : vector<2x128xf32>
    %259 = tpu.matmul %256, %258, %cst_88 {dimension_numbers = #tpu.dot_dimension_numbers<[1], [0], [0], [1], [0, 0, 1, 1], [], []>} : vector<2x64xf32>, vector<64x128xf32>, vector<2x128xf32> -> vector<2x128xf32>
    %260 = arith.addf %253, %259 : vector<2x128xf32>
    %261 = vector.extract_strided_slice %20 {offsets = [7, 0], sizes = [1, 64], strides = [1, 1]} : vector<8x64xf32> to vector<1x64xf32>
    %262 = vector.extract_strided_slice %39 {offsets = [7, 0], sizes = [1, 64], strides = [1, 1]} : vector<8x64xf32> to vector<1x64xf32>
    %263 = tpu.concatenate %261, %262 in 0 : vector<1x64xf32>, vector<1x64xf32> -> vector<2x64xf32>
    %c7_89 = arith.constant 7 : index
    %c0_90 = arith.constant 0 : index
    %c0_91 = arith.constant 0 : index
    %264 = vector.load %arg7[%c7_89, %c0_90, %c0_91] : memref<8x64x128xf32, #tpu.memory_space<vmem>>, vector<1x64x128xf32>
    %265 = vector.shape_cast %264 : vector<1x64x128xf32> to vector<64x128xf32>
    %cst_92 = arith.constant dense<0.000000e+00> : vector<2x128xf32>
    %266 = tpu.matmul %263, %265, %cst_92 {dimension_numbers = #tpu.dot_dimension_numbers<[1], [0], [0], [1], [0, 0, 1, 1], [], []>} : vector<2x64xf32>, vector<64x128xf32>, vector<2x128xf32> -> vector<2x128xf32>
    %267 = arith.addf %260, %266 : vector<2x128xf32>
    %cst_93 = arith.constant 0.000000e+00 : f32
    %268 = vector.broadcast %cst_93 : f32 to vector<2x128xf32>
    %269 = arith.maximumf %267, %268 : vector<2x128xf32>
    %c0_94 = arith.constant 0 : index
    %c0_95 = arith.constant 0 : index
    %270 = vector.load %arg10[%c0_94, %c0_95] : memref<128x8xf32, #tpu.memory_space<vmem>>, vector<128x8xf32>
    %cst_96 = arith.constant dense<0.000000e+00> : vector<2x8xf32>
    %271 = tpu.matmul %269, %270, %cst_96 {dimension_numbers = #tpu.dot_dimension_numbers<[1], [0], [0], [1], [0, 0, 1, 1], [], []>} : vector<2x128xf32>, vector<128x8xf32>, vector<2x8xf32> -> vector<2x8xf32>
    %c0_97 = arith.constant 0 : index
    %c0_98 = arith.constant 0 : index
    %272 = vector.load %arg11[%c0_97, %c0_98] : memref<1x8xf32, #tpu.memory_space<vmem>>, vector<1x8xf32>
    %273 = vector.broadcast %272 : vector<1x8xf32> to vector<2x8xf32>
    %274 = arith.addf %271, %273 : vector<2x8xf32>
    %c0_99 = arith.constant 0 : index
    %c0_100 = arith.constant 0 : index
    %275 = vector.load %arg12[%c0_99, %c0_100] : memref<2x8xf32, #tpu.memory_space<vmem>>, vector<2x8xf32>
    tpu.vector_store %arg12[%c0_99, %c0_100], %274 {strides = array<i32>} : memref<2x8xf32, #tpu.memory_space<vmem>>, vector<2x8xf32>,
    return
  }
}

</mosaic_0001>

<llo_original>
// kernel: hybrid_forward.1
$region0: #{hybrid_forward.1}
  #allocation0 [shape = 'u32[]', space=smem, size = 0x4, offset = 0x4, fixed_abs, tag = 'smem constant byte address 0x4 - core index']
  #allocation1 [shape = 'u32[144,128]{1,0:T(1,128)}', space=vmem, size = 0x12000, scoped, tag = 'internal scratch']
  %s0 = inlined_call_operand.vmem [shape: f32[8,36,64], index: 0, kind: input, shape index: {}]
  %s1 = inlined_call_operand.vmem [shape: f32[8,36], index: 1, kind: input, shape index: {}]
  %s2 = inlined_call_operand.vmem [shape: f32[8,1], index: 2, kind: input, shape index: {}]
  %s3 = inlined_call_operand.vmem [shape: f32[16,6], index: 3, kind: input, shape index: {}]
  %s4 = inlined_call_operand.vmem [shape: f32[6,128], index: 4, kind: input, shape index: {}]
  %s5 = inlined_call_operand.vmem [shape: f32[32,128], index: 5, kind: input, shape index: {}]
  %s6 = inlined_call_operand.vmem [shape: f32[1,128], index: 6, kind: input, shape index: {}]
  %s7 = inlined_call_operand.vmem [shape: f32[8,64,128], index: 7, kind: input, shape index: {}]
  %s8 = inlined_call_operand.vmem [shape: f32[32,128], index: 8, kind: input, shape index: {}]
  %s9 = inlined_call_operand.vmem [shape: f32[1,128], index: 9, kind: input, shape index: {}]
  %s10 = inlined_call_operand.vmem [shape: f32[128,8], index: 10, kind: input, shape index: {}]
  %s11 = inlined_call_operand.vmem [shape: f32[1,8], index: 11, kind: input, shape index: {}]
  %s12 = inlined_call_operand.hbm [shape: f32[2,8], index: 12, kind: output, shape index: {}]
  %s13 = sld [smem:[#allocation0]]
  $region58: #{hybrid_forward.1} parent=0
    _
  %s15 = ssub.s32 1, %s13
  %s16 = scalar_select 0, %s15, %s13
  $region1: #{hybrid_forward.1} parent=0
    #allocation2 [shape = 'u8[1024]{0}', space=vmem, size = 0x400, scoped, tag = 'output window, operand 0, single buffered']
    #allocation3 [shape = 's32[1]{0}', space=sflag, size = 0x4, scoped, tag = 'scoped memory for hybrid_forward.1']
    %17 = vsyncpa [#allocation3], 0
    // Predicated region
    $region2: #{hybrid_forward.1} parent=1 // pred_check
      _
    $region3: #{hybrid_forward.1} parent=1 // pred_check_branch
      %19 = sbr.rel (0) target = $region5
    $region4: #{hybrid_forward.1} parent=1 // pred_region
      _
    $region5: #{hybrid_forward.1} parent=1 // pred_fallthru
      _
    // Predicated region
    $region6: #{hybrid_forward.1} parent=1 // pred_check
      _
    $region7: #{hybrid_forward.1} parent=1 // pred_check_branch
      %21 = sbr.rel (0) target = $region9
    $region8: #{hybrid_forward.1} parent=1 // pred_region
      _
    $region9: #{hybrid_forward.1} parent=1 // pred_fallthru
      _
    // Predicated region
    $region10: #{hybrid_forward.1} parent=1 // pred_check
      _
    $region11: #{hybrid_forward.1} parent=1 // pred_check_branch
      %23 = sbr.rel (0) target = $region13
    $region12: #{hybrid_forward.1} parent=1 // pred_region
      _
    $region13: #{hybrid_forward.1} parent=1 // pred_fallthru
      _
    // Predicated region
    $region14: #{hybrid_forward.1} parent=1 // pred_check
      _
    $region15: #{hybrid_forward.1} parent=1 // pred_check_branch
      %25 = sbr.rel (0) target = $region17
    $region16: #{hybrid_forward.1} parent=1 // pred_region
      _
    $region17: #{hybrid_forward.1} parent=1 // pred_fallthru
      _
    // Predicated region
    $region18: #{hybrid_forward.1} parent=1 // pred_check
      _
    $region19: #{hybrid_forward.1} parent=1 // pred_check_branch
      %27 = sbr.rel (0) target = $region21
    $region20: #{hybrid_forward.1} parent=1 // pred_region
      _
    $region21: #{hybrid_forward.1} parent=1 // pred_fallthru
      _
    // Predicated region
    $region22: #{hybrid_forward.1} parent=1 // pred_check
      _
    $region23: #{hybrid_forward.1} parent=1 // pred_check_branch
      %29 = sbr.rel (0) target = $region25
    $region24: #{hybrid_forward.1} parent=1 // pred_region
      _
    $region25: #{hybrid_forward.1} parent=1 // pred_fallthru
      _
    // Predicated region
    $region26: #{hybrid_forward.1} parent=1 // pred_check
      _
    $region27: #{hybrid_forward.1} parent=1 // pred_check_branch
      %31 = sbr.rel (0) target = $region29
    $region28: #{hybrid_forward.1} parent=1 // pred_region
      _
    $region29: #{hybrid_forward.1} parent=1 // pred_fallthru
      _
    // Predicated region
    $region30: #{hybrid_forward.1} parent=1 // pred_check
      _
    $region31: #{hybrid_forward.1} parent=1 // pred_check_branch
      %33 = sbr.rel (0) target = $region33
    $region32: #{hybrid_forward.1} parent=1 // pred_region
      _
    $region33: #{hybrid_forward.1} parent=1 // pred_fallthru
      _
    // Predicated region
    $region34: #{hybrid_forward.1} parent=1 // pred_check
      _
    $region35: #{hybrid_forward.1} parent=1 // pred_check_branch
      %35 = sbr.rel (0) target = $region37
    $region36: #{hybrid_forward.1} parent=1 // pred_region
      _
    $region37: #{hybrid_forward.1} parent=1 // pred_fallthru
      _
    // Predicated region
    $region38: #{hybrid_forward.1} parent=1 // pred_check
      _
    $region39: #{hybrid_forward.1} parent=1 // pred_check_branch
      %37 = sbr.rel (0) target = $region41
    $region40: #{hybrid_forward.1} parent=1 // pred_region
      _
    $region41: #{hybrid_forward.1} parent=1 // pred_fallthru
      _
    // Predicated region
    $region42: #{hybrid_forward.1} parent=1 // pred_check
      _
    $region43: #{hybrid_forward.1} parent=1 // pred_check_branch
      %39 = sbr.rel (0) target = $region45
    $region44: #{hybrid_forward.1} parent=1 // pred_region
      _
    $region45: #{hybrid_forward.1} parent=1 // pred_fallthru
      _
    // Predicated region
    $region46: #{hybrid_forward.1} parent=1 // pred_check
      _
    $region47: #{hybrid_forward.1} parent=1 // pred_check_branch
      %41 = sbr.rel (0) target = $region49
    $region48: #{hybrid_forward.1} parent=1 // pred_region
      _
    $region49: #{hybrid_forward.1} parent=1 // pred_fallthru
      _
    %v42 = vld [vmem:[%s1] sm:$0xff]
    %v43 = vld [vmem:[%s2] sm:$0xff]
    %v44 = vld [vmem:[%s0] sm:$0xff]
    %v45 = vld [vmem:[%s0 + $0x8] sm:$0xff]
    %v46 = vld [vmem:[%s0 + $0x10] sm:$0xff]
    %v47 = vld [vmem:[%s0 + $0x18] sm:$0xff]
    %v48 = vld [vmem:[%s0 + $0x20] sm:$0xf]
    %vm49 = vcmask 293888
    %v51 = vsel %vm49, %v42, 0
    %vm53 = vcmask 1043456
    %v55 = vsel %vm53, %v48, 0
    %57 = vmatprep.subr.mxu0 0.0
    %58 = vmatpush1.msra.mxu0 %v44
    %59 = vmatprep.subr.mxu0 0.0
    %60 = vmatpush1.msra.mxu0 %v45
    %61 = vmatprep.subr.mxu0 0.0
    %62 = vmatpush1.msra.mxu0 %v46
    %63 = vmatprep.subr.mxu0 0.0
    %64 = vmatpush1.msra.mxu0 %v47
    %65 = vmatprep.subr.mxu0 0.0
    %66 = vmatpush1.msra.mxu0 %v55
    %67 = vmatprep.subr.mxu0 0.0
    %68 = vmatpush1.msra.mxu0 0.0
    %69 = vmatprep.subr.mxu0 0.0
    %70 = vmatpush1.msra.mxu0 0.0
    %71 = vmatprep.subr.mxu0 0.0
    %72 = vmatpush1.msra.mxu0 0.0
    %73 = vmatprep.subr.mxu0 0.0
    %74 = vmatpush1.msra.mxu0 0.0
    %75 = vmatprep.subr.mxu0 0.0
    %76 = vmatpush1.msra.mxu0 0.0
    %77 = vmatprep.subr.mxu0 0.0
    %78 = vmatpush1.msra.mxu0 0.0
    %79 = vmatprep.subr.mxu0 0.0
    %80 = vmatpush1.msra.mxu0 0.0
    %81 = vmatprep.subr.mxu0 0.0
    %82 = vmatpush1.msra.mxu0 0.0
    %83 = vmatprep.subr.mxu0 0.0
    %84 = vmatpush1.msra.mxu0 0.0
    %85 = vmatprep.subr.mxu0 0.0
    %86 = vmatpush1.msra.mxu0 0.0
    %87 = vmatprep.subr.mxu0 0.0
    %88 = vmatpush1.msra.mxu0 0.0
    %89 = vmatprep.subr.mxu0 0.0
    %90 = vmatpush1.msra.mxu0 0.0
    %91 = vmatprep.subr.mxu0 0.0
    %92 = vmatpush1.msra.mxu0 0.0
    %93 = vmatprep.subr.mxu0 0.0
    %94 = vmatpush1.msra.mxu0 0.0
    %95 = vmatprep.subr.mxu0 0.0
    %96 = vmatpush1.msra.mxu0 0.0
    %97 = vmatprep.subr.mxu0 0.0
    %98 = vmatpush1.msra.mxu0 0.0
    %99 = vmatprep.subr.mxu0 0.0
    %100 = vmatpush1.msra.mxu0 0.0
    %101 = vmatprep.subr.mxu0 0.0
    %102 = vmatpush1.msra.mxu0 0.0
    %103 = vmatprep.subr.mxu0 0.0
    %104 = vmatpush1.msra.mxu0 0.0
    %105 = vmatprep.subr.mxu0 0.0
    %106 = vmatpush1.msra.mxu0 0.0
    %107 = vmatprep.subr.mxu0 0.0
    %108 = vmatpush1.msra.mxu0 0.0
    %109 = vmatprep.subr.mxu0 0.0
    %110 = vmatpush1.msra.mxu0 0.0
    %111 = vmatprep.subr.mxu0 0.0
    %112 = vmatpush1.msra.mxu0 0.0
    %113 = vmatprep.subr.mxu0 0.0
    %114 = vmatpush1.msra.mxu0 0.0
    %115 = vmatprep.subr.mxu0 0.0
    %116 = vmatpush1.msra.mxu0 0.0
    %117 = vmatprep.subr.mxu0 0.0
    %118 = vmatpush1.msra.mxu0 0.0
    %119 = vmatprep.subr.mxu0 0.0
    %120 = vmatpush1.msra.mxu0 0.0
    %121 = vmatprep.mubr.f32.mxu0 0.0
    %122 = vmatmul.mubr.f32.gmra.mrb[0].mxu0 %v51
    %v123 = vpop.f32.mrb[0].mxu0
    %v124 = vadd.f32 0.0, %v123
    %v125 = vpop.f32.mrb[0].mxu0
    %126 = vdwg.mxu0
    %s127 = scalar_lea.vmem %s0, 40
    %v128 = vld [vmem:[%s127] sm:$0xff]
    %v129 = vld [vmem:[%s127 + $0x8] sm:$0xff]
    %v130 = vld [vmem:[%s127 + $0x10] sm:$0xff]
    %v131 = vld [vmem:[%s127 + $0x18] sm:$0xff]
    %v132 = vld [vmem:[%s127 + $0x20] sm:$0xf]
    %v134 = vsel %vm53, %v132, 0
    %136 = vmatprep.subr.mxu0 0.0
    %137 = vmatpush1.msra.mxu0 %v128
    %138 = vmatprep.subr.mxu0 0.0
    %139 = vmatpush1.msra.mxu0 %v129
    %140 = vmatprep.subr.mxu0 0.0
    %141 = vmatpush1.msra.mxu0 %v130
    %142 = vmatprep.subr.mxu0 0.0
    %143 = vmatpush1.msra.mxu0 %v131
    %144 = vmatprep.subr.mxu0 0.0
    %145 = vmatpush1.msra.mxu0 %v134
    %146 = vmatprep.subr.mxu0 0.0
    %147 = vmatpush1.msra.mxu0 0.0
    %148 = vmatprep.subr.mxu0 0.0
    %149 = vmatpush1.msra.mxu0 0.0
    %150 = vmatprep.subr.mxu0 0.0
    %151 = vmatpush1.msra.mxu0 0.0
    %152 = vmatprep.subr.mxu0 0.0
    %153 = vmatpush1.msra.mxu0 0.0
    %154 = vmatprep.subr.mxu0 0.0
    %155 = vmatpush1.msra.mxu0 0.0
    %156 = vmatprep.subr.mxu0 0.0
    %157 = vmatpush1.msra.mxu0 0.0
    %158 = vmatprep.subr.mxu0 0.0
    %159 = vmatpush1.msra.mxu0 0.0
    %160 = vmatprep.subr.mxu0 0.0
    %161 = vmatpush1.msra.mxu0 0.0
    %162 = vmatprep.subr.mxu0 0.0
    %163 = vmatpush1.msra.mxu0 0.0
    %164 = vmatprep.subr.mxu0 0.0
    %165 = vmatpush1.msra.mxu0 0.0
    %166 = vmatprep.subr.mxu0 0.0
    %167 = vmatpush1.msra.mxu0 0.0
    %168 = vmatprep.subr.mxu0 0.0
    %169 = vmatpush1.msra.mxu0 0.0
    %170 = vmatprep.subr.mxu0 0.0
    %171 = vmatpush1.msra.mxu0 0.0
    %172 = vmatprep.subr.mxu0 0.0
    %173 = vmatpush1.msra.mxu0 0.0
    %174 = vmatprep.subr.mxu0 0.0
    %175 = vmatpush1.msra.mxu0 0.0
    %176 = vmatprep.subr.mxu0 0.0
    %177 = vmatpush1.msra.mxu0 0.0
    %178 = vmatprep.subr.mxu0 0.0
    %179 = vmatpush1.msra.mxu0 0.0
    %180 = vmatprep.subr.mxu0 0.0
    %181 = vmatpush1.msra.mxu0 0.0
    %182 = vmatprep.subr.mxu0 0.0
    %183 = vmatpush1.msra.mxu0 0.0
    %184 = vmatprep.subr.mxu0 0.0
    %185 = vmatpush1.msra.mxu0 0.0
    %186 = vmatprep.subr.mxu0 0.0
    %187 = vmatpush1.msra.mxu0 0.0
    %188 = vmatprep.subr.mxu0 0.0
    %189 = vmatpush1.msra.mxu0 0.0
    %190 = vmatprep.subr.mxu0 0.0
    %191 = vmatpush1.msra.mxu0 0.0
    %192 = vmatprep.subr.mxu0 0.0
    %193 = vmatpush1.msra.mxu0 0.0
    %194 = vmatprep.subr.mxu0 0.0
    %195 = vmatpush1.msra.mxu0 0.0
    %196 = vmatprep.subr.mxu0 0.0
    %197 = vmatpush1.msra.mxu0 0.0
    %198 = vmatprep.subr.mxu0 0.0
    %199 = vmatpush1.msra.mxu0 0.0
    %200 = vmatprep.mubr.f32.mxu0 0.0
    %201 = vmatmul.mubr.f32.gmra.mrb[0].mxu0 %v51
    %v202 = vpop.f32.mrb[0].mxu0
    %v203 = vadd.f32 0.0, %v202
    %v204 = vpop.f32.mrb[0].mxu0
    %205 = vdwg.mxu0
    %v206 = vmax.f32 %v124, %v203
    %s207 = scalar_lea.vmem %s0, 80
    %v208 = vld [vmem:[%s207] sm:$0xff]
    %v209 = vld [vmem:[%s207 + $0x8] sm:$0xff]
    %v210 = vld [vmem:[%s207 + $0x10] sm:$0xff]
    %v211 = vld [vmem:[%s207 + $0x18] sm:$0xff]
    %v212 = vld [vmem:[%s207 + $0x20] sm:$0xf]
    %v214 = vsel %vm53, %v212, 0
    %216 = vmatprep.subr.mxu0 0.0
    %217 = vmatpush1.msra.mxu0 %v208
    %218 = vmatprep.subr.mxu0 0.0
    %219 = vmatpush1.msra.mxu0 %v209
    %220 = vmatprep.subr.mxu0 0.0
    %221 = vmatpush1.msra.mxu0 %v210
    %222 = vmatprep.subr.mxu0 0.0
    %223 = vmatpush1.msra.mxu0 %v211
    %224 = vmatprep.subr.mxu0 0.0
    %225 = vmatpush1.msra.mxu0 %v214
    %226 = vmatprep.subr.mxu0 0.0
    %227 = vmatpush1.msra.mxu0 0.0
    %228 = vmatprep.subr.mxu0 0.0
    %229 = vmatpush1.msra.mxu0 0.0
    %230 = vmatprep.subr.mxu0 0.0
    %231 = vmatpush1.msra.mxu0 0.0
    %232 = vmatprep.subr.mxu0 0.0
    %233 = vmatpush1.msra.mxu0 0.0
    %234 = vmatprep.subr.mxu0 0.0
    %235 = vmatpush1.msra.mxu0 0.0
    %236 = vmatprep.subr.mxu0 0.0
    %237 = vmatpush1.msra.mxu0 0.0
    %238 = vmatprep.subr.mxu0 0.0
    %239 = vmatpush1.msra.mxu0 0.0
    %240 = vmatprep.subr.mxu0 0.0
    %241 = vmatpush1.msra.mxu0 0.0
    %242 = vmatprep.subr.mxu0 0.0
    %243 = vmatpush1.msra.mxu0 0.0
    %244 = vmatprep.subr.mxu0 0.0
    %245 = vmatpush1.msra.mxu0 0.0
    %246 = vmatprep.subr.mxu0 0.0
    %247 = vmatpush1.msra.mxu0 0.0
    %248 = vmatprep.subr.mxu0 0.0
    %249 = vmatpush1.msra.mxu0 0.0
    %250 = vmatprep.subr.mxu0 0.0
    %251 = vmatpush1.msra.mxu0 0.0
    %252 = vmatprep.subr.mxu0 0.0
    %253 = vmatpush1.msra.mxu0 0.0
    %254 = vmatprep.subr.mxu0 0.0
    %255 = vmatpush1.msra.mxu0 0.0
    %256 = vmatprep.subr.mxu0 0.0
    %257 = vmatpush1.msra.mxu0 0.0
    %258 = vmatprep.subr.mxu0 0.0
    %259 = vmatpush1.msra.mxu0 0.0
    %260 = vmatprep.subr.mxu0 0.0
    %261 = vmatpush1.msra.mxu0 0.0
    %262 = vmatprep.subr.mxu0 0.0
    %263 = vmatpush1.msra.mxu0 0.0
    %264 = vmatprep.subr.mxu0 0.0
    %265 = vmatpush1.msra.mxu0 0.0
    %266 = vmatprep.subr.mxu0 0.0
    %267 = vmatpush1.msra.mxu0 0.0
    %268 = vmatprep.subr.mxu0 0.0
    %269 = vmatpush1.msra.mxu0 0.0
    %270 = vmatprep.subr.mxu0 0.0
    %271 = vmatpush1.msra.mxu0 0.0
    %272 = vmatprep.subr.mxu0 0.0
    %273 = vmatpush1.msra.mxu0 0.0
    %274 = vmatprep.subr.mxu0 0.0
    %275 = vmatpush1.msra.mxu0 0.0
    %276 = vmatprep.subr.mxu0 0.0
    %277 = vmatpush1.msra.mxu0 0.0
    %278 = vmatprep.subr.mxu0 0.0
    %279 = vmatpush1.msra.mxu0 0.0
    %280 = vmatprep.mubr.f32.mxu0 0.0
    %281 = vmatmul.mubr.f32.gmra.mrb[0].mxu0 %v51
    %v282 = vpop.f32.mrb[0].mxu0
    %v283 = vadd.f32 0.0, %v282
    %v284 = vpop.f32.mrb[0].mxu0
    %285 = vdwg.mxu0
    %v286 = vmax.f32 %v206, %v283
    %s287 = scalar_lea.vmem %s0, 120
    %v288 = vld [vmem:[%s287] sm:$0xff]
    %v289 = vld [vmem:[%s287 + $0x8] sm:$0xff]
    %v290 = vld [vmem:[%s287 + $0x10] sm:$0xff]
    %v291 = vld [vmem:[%s287 + $0x18] sm:$0xff]
    %v292 = vld [vmem:[%s287 + $0x20] sm:$0xf]
    %v294 = vsel %vm53, %v292, 0
    %296 = vmatprep.subr.mxu0 0.0
    %297 = vmatpush1.msra.mxu0 %v288
    %298 = vmatprep.subr.mxu0 0.0
    %299 = vmatpush1.msra.mxu0 %v289
    %300 = vmatprep.subr.mxu0 0.0
    %301 = vmatpush1.msra.mxu0 %v290
    %302 = vmatprep.subr.mxu0 0.0
    %303 = vmatpush1.msra.mxu0 %v291
    %304 = vmatprep.subr.mxu0 0.0
    %305 = vmatpush1.msra.mxu0 %v294
    %306 = vmatprep.subr.mxu0 0.0
    %307 = vmatpush1.msra.mxu0 0.0
    %308 = vmatprep.subr.mxu0 0.0
    %309 = vmatpush1.msra.mxu0 0.0
    %310 = vmatprep.subr.mxu0 0.0
    %311 = vmatpush1.msra.mxu0 0.0
    %312 = vmatprep.subr.mxu0 0.0
    %313 = vmatpush1.msra.mxu0 0.0
    %314 = vmatprep.subr.mxu0 0.0
    %315 = vmatpush1.msra.mxu0 0.0
    %316 = vmatprep.subr.mxu0 0.0
    %317 = vmatpush1.msra.mxu0 0.0
    %318 = vmatprep.subr.mxu0 0.0
    %319 = vmatpush1.msra.mxu0 0.0
    %320 = vmatprep.subr.mxu0 0.0
    %321 = vmatpush1.msra.mxu0 0.0
    %322 = vmatprep.subr.mxu0 0.0
    %323 = vmatpush1.msra.mxu0 0.0
    %324 = vmatprep.subr.mxu0 0.0
    %325 = vmatpush1.msra.mxu0 0.0
    %326 = vmatprep.subr.mxu0 0.0
    %327 = vmatpush1.msra.mxu0 0.0
    %328 = vmatprep.subr.mxu0 0.0
    %329 = vmatpush1.msra.mxu0 0.0
    %330 = vmatprep.subr.mxu0 0.0
    %331 = vmatpush1.msra.mxu0 0.0
    %332 = vmatprep.subr.mxu0 0.0
    %333 = vmatpush1.msra.mxu0 0.0
    %334 = vmatprep.subr.mxu0 0.0
    %335 = vmatpush1.msra.mxu0 0.0
    %336 = vmatprep.subr.mxu0 0.0
    %337 = vmatpush1.msra.mxu0 0.0
    %338 = vmatprep.subr.mxu0 0.0
    %339 = vmatpush1.msra.mxu0 0.0
    %340 = vmatprep.subr.mxu0 0.0
    %341 = vmatpush1.msra.mxu0 0.0
    %342 = vmatprep.subr.mxu0 0.0
    %343 = vmatpush1.msra.mxu0 0.0
    %344 = vmatprep.subr.mxu0 0.0
    %345 = vmatpush1.msra.mxu0 0.0
    %346 = vmatprep.subr.mxu0 0.0
    %347 = vmatpush1.msra.mxu0 0.0
    %348 = vmatprep.subr.mxu0 0.0
    %349 = vmatpush1.msra.mxu0 0.0
    %350 = vmatprep.subr.mxu0 0.0
    %351 = vmatpush1.msra.mxu0 0.0
    %352 = vmatprep.subr.mxu0 0.0
    %353 = vmatpush1.msra.mxu0 0.0
    %354 = vmatprep.subr.mxu0 0.0
    %355 = vmatpush1.msra.mxu0 0.0
    %356 = vmatprep.subr.mxu0 0.0
    %357 = vmatpush1.msra.mxu0 0.0
    %358 = vmatprep.subr.mxu0 0.0
    %359 = vmatpush1.msra.mxu0 0.0
    %360 = vmatprep.mubr.f32.mxu0 0.0
    %361 = vmatmul.mubr.f32.gmra.mrb[0].mxu0 %v51
    %v362 = vpop.f32.mrb[0].mxu0
    %v363 = vadd.f32 0.0, %v362
    %v364 = vpop.f32.mrb[0].mxu0
    %365 = vdwg.mxu0
    %v366 = vmax.f32 %v286, %v363
    %368 = vset.pattern.permute.xlu0 0
    %369 = vperm.xlu0 %368, %v43
    %v370 = vpop.permute.xlu0 %369
    %v372 = vadd.f32 %v366, %v370
    %v373 = vmax.f32 %v372, 0.0
    %s374 = scalar_lea.vmem %s0, 160
    %v375 = vld [vmem:[%s374] sm:$0xff]
    %v376 = vld [vmem:[%s374 + $0x8] sm:$0xff]
    %v377 = vld [vmem:[%s374 + $0x10] sm:$0xff]
    %v378 = vld [vmem:[%s374 + $0x18] sm:$0xff]
    %v379 = vld [vmem:[%s374 + $0x20] sm:$0xf]
    %v381 = vsel %vm53, %v379, 0
    %383 = vmatprep.subr.mxu0 0.0
    %384 = vmatpush1.msra.mxu0 %v375
    %385 = vmatprep.subr.mxu0 0.0
    %386 = vmatpush1.msra.mxu0 %v376
    %387 = vmatprep.subr.mxu0 0.0
    %388 = vmatpush1.msra.mxu0 %v377
    %389 = vmatprep.subr.mxu0 0.0
    %390 = vmatpush1.msra.mxu0 %v378
    %391 = vmatprep.subr.mxu0 0.0
    %392 = vmatpush1.msra.mxu0 %v381
    %393 = vmatprep.subr.mxu0 0.0
    %394 = vmatpush1.msra.mxu0 0.0
    %395 = vmatprep.subr.mxu0 0.0
    %396 = vmatpush1.msra.mxu0 0.0
    %397 = vmatprep.subr.mxu0 0.0
    %398 = vmatpush1.msra.mxu0 0.0
    %399 = vmatprep.subr.mxu0 0.0
    %400 = vmatpush1.msra.mxu0 0.0
    %401 = vmatprep.subr.mxu0 0.0
    %402 = vmatpush1.msra.mxu0 0.0
    %403 = vmatprep.subr.mxu0 0.0
    %404 = vmatpush1.msra.mxu0 0.0
    %405 = vmatprep.subr.mxu0 0.0
    %406 = vmatpush1.msra.mxu0 0.0
    %407 = vmatprep.subr.mxu0 0.0
    %408 = vmatpush1.msra.mxu0 0.0
    %409 = vmatprep.subr.mxu0 0.0
    %410 = vmatpush1.msra.mxu0 0.0
    %411 = vmatprep.subr.mxu0 0.0
    %412 = vmatpush1.msra.mxu0 0.0
    %413 = vmatprep.subr.mxu0 0.0
    %414 = vmatpush1.msra.mxu0 0.0
    %415 = vmatprep.subr.mxu0 0.0
    %416 = vmatpush1.msra.mxu0 0.0
    %417 = vmatprep.subr.mxu0 0.0
    %418 = vmatpush1.msra.mxu0 0.0
    %419 = vmatprep.subr.mxu0 0.0
    %420 = vmatpush1.msra.mxu0 0.0
    %421 = vmatprep.subr.mxu0 0.0
    %422 = vmatpush1.msra.mxu0 0.0
    %423 = vmatprep.subr.mxu0 0.0
    %424 = vmatpush1.msra.mxu0 0.0
    %425 = vmatprep.subr.mxu0 0.0
    %426 = vmatpush1.msra.mxu0 0.0
    %427 = vmatprep.subr.mxu0 0.0
    %428 = vmatpush1.msra.mxu0 0.0
    %429 = vmatprep.subr.mxu0 0.0
    %430 = vmatpush1.msra.mxu0 0.0
    %431 = vmatprep.subr.mxu0 0.0
    %432 = vmatpush1.msra.mxu0 0.0
    %433 = vmatprep.subr.mxu0 0.0
    %434 = vmatpush1.msra.mxu0 0.0
    %435 = vmatprep.subr.mxu0 0.0
    %436 = vmatpush1.msra.mxu0 0.0
    %437 = vmatprep.subr.mxu0 0.0
    %438 = vmatpush1.msra.mxu0 0.0
    %439 = vmatprep.subr.mxu0 0.0
    %440 = vmatpush1.msra.mxu0 0.0
    %441 = vmatprep.subr.mxu0 0.0
    %442 = vmatpush1.msra.mxu0 0.0
    %443 = vmatprep.subr.mxu0 0.0
    %444 = vmatpush1.msra.mxu0 0.0
    %445 = vmatprep.subr.mxu0 0.0
    %446 = vmatpush1.msra.mxu0 0.0
    %447 = vmatprep.mubr.f32.mxu0 0.0
    %448 = vmatmul.mubr.f32.gmra.mrb[0].mxu0 %v51
    %v449 = vpop.f32.mrb[0].mxu0
    %v450 = vadd.f32 0.0, %v449
    %v451 = vpop.f32.mrb[0].mxu0
    %452 = vdwg.mxu0
    %s453 = scalar_lea.vmem %s0, 200
    %v454 = vld [vmem:[%s453] sm:$0xff]
    %v455 = vld [vmem:[%s453 + $0x8] sm:$0xff]
    %v456 = vld [vmem:[%s453 + $0x10] sm:$0xff]
    %v457 = vld [vmem:[%s453 + $0x18] sm:$0xff]
    %v458 = vld [vmem:[%s453 + $0x20] sm:$0xf]
    %v460 = vsel %vm53, %v458, 0
    %462 = vmatprep.subr.mxu0 0.0
    %463 = vmatpush1.msra.mxu0 %v454
    %464 = vmatprep.subr.mxu0 0.0
    %465 = vmatpush1.msra.mxu0 %v455
    %466 = vmatprep.subr.mxu0 0.0
    %467 = vmatpush1.msra.mxu0 %v456
    %468 = vmatprep.subr.mxu0 0.0
    %469 = vmatpush1.msra.mxu0 %v457
    %470 = vmatprep.subr.mxu0 0.0
    %471 = vmatpush1.msra.mxu0 %v460
    %472 = vmatprep.subr.mxu0 0.0
    %473 = vmatpush1.msra.mxu0 0.0
    %474 = vmatprep.subr.mxu0 0.0
    %475 = vmatpush1.msra.mxu0 0.0
    %476 = vmatprep.subr.mxu0 0.0
    %477 = vmatpush1.msra.mxu0 0.0
    %478 = vmatprep.subr.mxu0 0.0
    %479 = vmatpush1.msra.mxu0 0.0
    %480 = vmatprep.subr.mxu0 0.0
    %481 = vmatpush1.msra.mxu0 0.0
    %482 = vmatprep.subr.mxu0 0.0
    %483 = vmatpush1.msra.mxu0 0.0
    %484 = vmatprep.subr.mxu0 0.0
    %485 = vmatpush1.msra.mxu0 0.0
    %486 = vmatprep.subr.mxu0 0.0
    %487 = vmatpush1.msra.mxu0 0.0
    %488 = vmatprep.subr.mxu0 0.0
    %489 = vmatpush1.msra.mxu0 0.0
    %490 = vmatprep.subr.mxu0 0.0
    %491 = vmatpush1.msra.mxu0 0.0
    %492 = vmatprep.subr.mxu0 0.0
    %493 = vmatpush1.msra.mxu0 0.0
    %494 = vmatprep.subr.mxu0 0.0
    %495 = vmatpush1.msra.mxu0 0.0
    %496 = vmatprep.subr.mxu0 0.0
    %497 = vmatpush1.msra.mxu0 0.0
    %498 = vmatprep.subr.mxu0 0.0
    %499 = vmatpush1.msra.mxu0 0.0
    %500 = vmatprep.subr.mxu0 0.0
    %501 = vmatpush1.msra.mxu0 0.0
    %502 = vmatprep.subr.mxu0 0.0
    %503 = vmatpush1.msra.mxu0 0.0
    %504 = vmatprep.subr.mxu0 0.0
    %505 = vmatpush1.msra.mxu0 0.0
    %506 = vmatprep.subr.mxu0 0.0
    %507 = vmatpush1.msra.mxu0 0.0
    %508 = vmatprep.subr.mxu0 0.0
    %509 = vmatpush1.msra.mxu0 0.0
    %510 = vmatprep.subr.mxu0 0.0
    %511 = vmatpush1.msra.mxu0 0.0
    %512 = vmatprep.subr.mxu0 0.0
    %513 = vmatpush1.msra.mxu0 0.0
    %514 = vmatprep.subr.mxu0 0.0
    %515 = vmatpush1.msra.mxu0 0.0
    %516 = vmatprep.subr.mxu0 0.0
    %517 = vmatpush1.msra.mxu0 0.0
    %518 = vmatprep.subr.mxu0 0.0
    %519 = vmatpush1.msra.mxu0 0.0
    %520 = vmatprep.subr.mxu0 0.0
    %521 = vmatpush1.msra.mxu0 0.0
    %522 = vmatprep.subr.mxu0 0.0
    %523 = vmatpush1.msra.mxu0 0.0
    %524 = vmatprep.subr.mxu0 0.0
    %525 = vmatpush1.msra.mxu0 0.0
    %526 = vmatprep.mubr.f32.mxu0 0.0
    %527 = vmatmul.mubr.f32.gmra.mrb[0].mxu0 %v51
    %v528 = vpop.f32.mrb[0].mxu0
    %v529 = vadd.f32 0.0, %v528
    %v530 = vpop.f32.mrb[0].mxu0
    %531 = vdwg.mxu0
    %v532 = vmax.f32 %v450, %v529
    %s533 = scalar_lea.vmem %s0, 240
    %v534 = vld [vmem:[%s533] sm:$0xff]
    %v535 = vld [vmem:[%s533 + $0x8] sm:$0xff]
    %v536 = vld [vmem:[%s533 + $0x10] sm:$0xff]
    %v537 = vld [vmem:[%s533 + $0x18] sm:$0xff]
    %v538 = vld [vmem:[%s533 + $0x20] sm:$0xf]
    %v540 = vsel %vm53, %v538, 0
    %542 = vmatprep.subr.mxu0 0.0
    %543 = vmatpush1.msra.mxu0 %v534
    %544 = vmatprep.subr.mxu0 0.0
    %545 = vmatpush1.msra.mxu0 %v535
    %546 = vmatprep.subr.mxu0 0.0
    %547 = vmatpush1.msra.mxu0 %v536
    %548 = vmatprep.subr.mxu0 0.0
    %549 = vmatpush1.msra.mxu0 %v537
    %550 = vmatprep.subr.mxu0 0.0
    %551 = vmatpush1.msra.mxu0 %v540
    %552 = vmatprep.subr.mxu0 0.0
    %553 = vmatpush1.msra.mxu0 0.0
    %554 = vmatprep.subr.mxu0 0.0
    %555 = vmatpush1.msra.mxu0 0.0
    %556 = vmatprep.subr.mxu0 0.0
    %557 = vmatpush1.msra.mxu0 0.0
    %558 = vmatprep.subr.mxu0 0.0
    %559 = vmatpush1.msra.mxu0 0.0
    %560 = vmatprep.subr.mxu0 0.0
    %561 = vmatpush1.msra.mxu0 0.0
    %562 = vmatprep.subr.mxu0 0.0
    %563 = vmatpush1.msra.mxu0 0.0
    %564 = vmatprep.subr.mxu0 0.0
    %565 = vmatpush1.msra.mxu0 0.0
    %566 = vmatprep.subr.mxu0 0.0
    %567 = vmatpush1.msra.mxu0 0.0
    %568 = vmatprep.subr.mxu0 0.0
    %569 = vmatpush1.msra.mxu0 0.0
    %570 = vmatprep.subr.mxu0 0.0
    %571 = vmatpush1.msra.mxu0 0.0
    %572 = vmatprep.subr.mxu0 0.0
    %573 = vmatpush1.msra.mxu0 0.0
    %574 = vmatprep.subr.mxu0 0.0
    %575 = vmatpush1.msra.mxu0 0.0
    %576 = vmatprep.subr.mxu0 0.0
    %577 = vmatpush1.msra.mxu0 0.0
    %578 = vmatprep.subr.mxu0 0.0
    %579 = vmatpush1.msra.mxu0 0.0
    %580 = vmatprep.subr.mxu0 0.0
    %581 = vmatpush1.msra.mxu0 0.0
    %582 = vmatprep.subr.mxu0 0.0
    %583 = vmatpush1.msra.mxu0 0.0
    %584 = vmatprep.subr.mxu0 0.0
    %585 = vmatpush1.msra.mxu0 0.0
    %586 = vmatprep.subr.mxu0 0.0
    %587 = vmatpush1.msra.mxu0 0.0
    %588 = vmatprep.subr.mxu0 0.0
    %589 = vmatpush1.msra.mxu0 0.0
    %590 = vmatprep.subr.mxu0 0.0
    %591 = vmatpush1.msra.mxu0 0.0
    %592 = vmatprep.subr.mxu0 0.0
    %593 = vmatpush1.msra.mxu0 0.0
    %594 = vmatprep.subr.mxu0 0.0
    %595 = vmatpush1.msra.mxu0 0.0
    %596 = vmatprep.subr.mxu0 0.0
    %597 = vmatpush1.msra.mxu0 0.0
    %598 = vmatprep.subr.mxu0 0.0
    %599 = vmatpush1.msra.mxu0 0.0
    %600 = vmatprep.subr.mxu0 0.0
    %601 = vmatpush1.msra.mxu0 0.0
    %602 = vmatprep.subr.mxu0 0.0
    %603 = vmatpush1.msra.mxu0 0.0
    %604 = vmatprep.subr.mxu0 0.0
    %605 = vmatpush1.msra.mxu0 0.0
    %606 = vmatprep.mubr.f32.mxu0 0.0
    %607 = vmatmul.mubr.f32.gmra.mrb[0].mxu0 %v51
    %v608 = vpop.f32.mrb[0].mxu0
    %v609 = vadd.f32 0.0, %v608
    %v610 = vpop.f32.mrb[0].mxu0
    %611 = vdwg.mxu0
    %v612 = vmax.f32 %v532, %v609
    %s613 = scalar_lea.vmem %s0, 280
    %v614 = vld [vmem:[%s613] sm:$0xff]
    %v615 = vld [vmem:[%s613 + $0x8] sm:$0xff]
    %v616 = vld [vmem:[%s613 + $0x10] sm:$0xff]
    %v617 = vld [vmem:[%s613 + $0x18] sm:$0xff]
    %v618 = vld [vmem:[%s613 + $0x20] sm:$0xf]
    %v620 = vsel %vm53, %v618, 0
    %622 = vmatprep.subr.mxu0 0.0
    %623 = vmatpush1.msra.mxu0 %v614
    %624 = vmatprep.subr.mxu0 0.0
    %625 = vmatpush1.msra.mxu0 %v615
    %626 = vmatprep.subr.mxu0 0.0
    %627 = vmatpush1.msra.mxu0 %v616
    %628 = vmatprep.subr.mxu0 0.0
    %629 = vmatpush1.msra.mxu0 %v617
    %630 = vmatprep.subr.mxu0 0.0
    %631 = vmatpush1.msra.mxu0 %v620
    %632 = vmatprep.subr.mxu0 0.0
    %633 = vmatpush1.msra.mxu0 0.0
    %634 = vmatprep.subr.mxu0 0.0
    %635 = vmatpush1.msra.mxu0 0.0
    %636 = vmatprep.subr.mxu0 0.0
    %637 = vmatpush1.msra.mxu0 0.0
    %638 = vmatprep.subr.mxu0 0.0
    %639 = vmatpush1.msra.mxu0 0.0
    %640 = vmatprep.subr.mxu0 0.0
    %641 = vmatpush1.msra.mxu0 0.0
    %642 = vmatprep.subr.mxu0 0.0
    %643 = vmatpush1.msra.mxu0 0.0
    %644 = vmatprep.subr.mxu0 0.0
    %645 = vmatpush1.msra.mxu0 0.0
    %646 = vmatprep.subr.mxu0 0.0
    %647 = vmatpush1.msra.mxu0 0.0
    %648 = vmatprep.subr.mxu0 0.0
    %649 = vmatpush1.msra.mxu0 0.0
    %650 = vmatprep.subr.mxu0 0.0
    %651 = vmatpush1.msra.mxu0 0.0
    %652 = vmatprep.subr.mxu0 0.0
    %653 = vmatpush1.msra.mxu0 0.0
    %654 = vmatprep.subr.mxu0 0.0
    %655 = vmatpush1.msra.mxu0 0.0
    %656 = vmatprep.subr.mxu0 0.0
    %657 = vmatpush1.msra.mxu0 0.0
    %658 = vmatprep.subr.mxu0 0.0
    %659 = vmatpush1.msra.mxu0 0.0
    %660 = vmatprep.subr.mxu0 0.0
    %661 = vmatpush1.msra.mxu0 0.0
    %662 = vmatprep.subr.mxu0 0.0
    %663 = vmatpush1.msra.mxu0 0.0
    %664 = vmatprep.subr.mxu0 0.0
    %665 = vmatpush1.msra.mxu0 0.0
    %666 = vmatprep.subr.mxu0 0.0
    %667 = vmatpush1.msra.mxu0 0.0
    %668 = vmatprep.subr.mxu0 0.0
    %669 = vmatpush1.msra.mxu0 0.0
    %670 = vmatprep.subr.mxu0 0.0
    %671 = vmatpush1.msra.mxu0 0.0
    %672 = vmatprep.subr.mxu0 0.0
    %673 = vmatpush1.msra.mxu0 0.0
    %674 = vmatprep.subr.mxu0 0.0
    %675 = vmatpush1.msra.mxu0 0.0
    %676 = vmatprep.subr.mxu0 0.0
    %677 = vmatpush1.msra.mxu0 0.0
    %678 = vmatprep.subr.mxu0 0.0
    %679 = vmatpush1.msra.mxu0 0.0
    %680 = vmatprep.subr.mxu0 0.0
    %681 = vmatpush1.msra.mxu0 0.0
    %682 = vmatprep.subr.mxu0 0.0
    %683 = vmatpush1.msra.mxu0 0.0
    %684 = vmatprep.subr.mxu0 0.0
    %685 = vmatpush1.msra.mxu0 0.0
    %686 = vmatprep.mubr.f32.mxu0 0.0
    %687 = vmatmul.mubr.f32.gmra.mrb[0].mxu0 %v51
    %v688 = vpop.f32.mrb[0].mxu0
    %v689 = vadd.f32 0.0, %v688
    %v690 = vpop.f32.mrb[0].mxu0
    %691 = vdwg.mxu0
    %v692 = vmax.f32 %v612, %v689
    %v693 = vadd.f32 %v692, %v370
    %v694 = vmax.f32 %v693, 0.0
    %v695 = vld [vmem:[%s3] sm:$0xff]
    %v696 = vld [vmem:[%s3 + $0x8] sm:$0xff]
    %v697 = vld [vmem:[%s4] sm:$0x3f]
    %v698 = vld [vmem:[%s6] sm:$0x1]
    %v700 = vlaneseq
    %v701 = vshrl.u32 %v700, 7
    %v702 = vsub.s32 0, %v701
    %v703 = vrot.slane %v698, %v702
    %vm705 = vcmask 48128
    %v707 = vsel %vm705, %v695, 0
    %v710 = vsel %vm705, %v696, 0
    %vm712 = vcmask 1045504
    %v714 = vsel %vm712, %v697, 0
    %716 = vmatprep.subr.mxu0 0.0
    %717 = vmatpush1.msra.mxu0 %v714
    %718 = vmatprep.subr.mxu0 0.0
    %719 = vmatpush1.msra.mxu0 0.0
    %720 = vmatprep.subr.mxu0 0.0
    %721 = vmatpush1.msra.mxu0 0.0
    %722 = vmatprep.subr.mxu0 0.0
    %723 = vmatpush1.msra.mxu0 0.0
    %724 = vmatprep.subr.mxu0 0.0
    %725 = vmatpush1.msra.mxu0 0.0
    %726 = vmatprep.subr.mxu0 0.0
    %727 = vmatpush1.msra.mxu0 0.0
    %728 = vmatprep.subr.mxu0 0.0
    %729 = vmatpush1.msra.mxu0 0.0
    %730 = vmatprep.subr.mxu0 0.0
    %731 = vmatpush1.msra.mxu0 0.0
    %732 = vmatprep.subr.mxu0 0.0
    %733 = vmatpush1.msra.mxu0 0.0
    %734 = vmatprep.subr.mxu0 0.0
    %735 = vmatpush1.msra.mxu0 0.0
    %736 = vmatprep.subr.mxu0 0.0
    %737 = vmatpush1.msra.mxu0 0.0
    %738 = vmatprep.subr.mxu0 0.0
    %739 = vmatpush1.msra.mxu0 0.0
    %740 = vmatprep.subr.mxu0 0.0
    %741 = vmatpush1.msra.mxu0 0.0
    %742 = vmatprep.subr.mxu0 0.0
    %743 = vmatpush1.msra.mxu0 0.0
    %744 = vmatprep.subr.mxu0 0.0
    %745 = vmatpush1.msra.mxu0 0.0
    %746 = vmatprep.subr.mxu0 0.0
    %747 = vmatpush1.msra.mxu0 0.0
    %748 = vmatprep.subr.mxu0 0.0
    %749 = vmatpush1.msra.mxu0 0.0
    %750 = vmatprep.subr.mxu0 0.0
    %751 = vmatpush1.msra.mxu0 0.0
    %752 = vmatprep.subr.mxu0 0.0
    %753 = vmatpush1.msra.mxu0 0.0
    %754 = vmatprep.subr.mxu0 0.0
    %755 = vmatpush1.msra.mxu0 0.0
    %756 = vmatprep.subr.mxu0 0.0
    %757 = vmatpush1.msra.mxu0 0.0
    %758 = vmatprep.subr.mxu0 0.0
    %759 = vmatpush1.msra.mxu0 0.0
    %760 = vmatprep.subr.mxu0 0.0
    %761 = vmatpush1.msra.mxu0 0.0
    %762 = vmatprep.subr.mxu0 0.0
    %763 = vmatpush1.msra.mxu0 0.0
    %764 = vmatprep.subr.mxu0 0.0
    %765 = vmatpush1.msra.mxu0 0.0
    %766 = vmatprep.subr.mxu0 0.0
    %767 = vmatpush1.msra.mxu0 0.0
    %768 = vmatprep.subr.mxu0 0.0
    %769 = vmatpush1.msra.mxu0 0.0
    %770 = vmatprep.subr.mxu0 0.0
    %771 = vmatpush1.msra.mxu0 0.0
    %772 = vmatprep.subr.mxu0 0.0
    %773 = vmatpush1.msra.mxu0 0.0
    %774 = vmatprep.subr.mxu0 0.0
    %775 = vmatpush1.msra.mxu0 0.0
    %776 = vmatprep.subr.mxu0 0.0
    %777 = vmatpush1.msra.mxu0 0.0
    %778 = vmatprep.subr.mxu0 0.0
    %779 = vmatpush1.msra.mxu0 0.0
    %780 = vmatprep.mubr.f32.mxu0 0.0
    %781 = vmatmul.mubr.f32.gmra.mrb[0].mxu0 %v707
    %v782 = vpop.f32.mrb[0].mxu0
    %v783 = vadd.f32 %v703, %v782
    %v784 = vpop.f32.mrb[0].mxu0
    %785 = vmatprep.mubr.f32.mxu0 0.0
    %786 = vmatmul.mubr.f32.gmra.mrb[0].mxu0 %v710
    %v787 = vpop.f32.mrb[0].mxu0
    %v788 = vadd.f32 %v703, %v787
    %v789 = vpop.f32.mrb[0].mxu0
    %790 = vdwg.mxu0
    %v791 = vld [vmem:[%s5] sm:$0xff]
    %v792 = vld [vmem:[%s5 + $0x8] sm:$0xff]
    %v793 = vld [vmem:[%s5 + $0x10] sm:$0xff]
    %v794 = vld [vmem:[%s5 + $0x18] sm:$0xff]
    %v795 = vlaneseq
    %v796 = vand.u32 %v795, 127
    %vm797 = vcmp.ge.s32.totalorder %v796, 64
    %vm798 = vcmp.lt.s32.totalorder %v796, 96
    %vm799 = vmand %vm797, %vm798
    %vm800 = vcmask 261120
    %v802 = vsel %vm800, 0.0, 0
    %804 = vmatprep.subr.mxu0 0.0
    %805 = vmatpush1.msra.mxu0 %v791
    %806 = vmatprep.subr.mxu0 0.0
    %807 = vmatpush1.msra.mxu0 %v792
    %808 = vmatprep.subr.mxu0 0.0
    %809 = vmatpush1.msra.mxu0 %v793
    %810 = vmatprep.subr.mxu0 0.0
    %811 = vmatpush1.msra.mxu0 %v794
    %812 = vmatprep.subr.mxu0 0.0
    %813 = vmatpush1.msra.mxu0 0.0
    %814 = vmatprep.subr.mxu0 0.0
    %815 = vmatpush1.msra.mxu0 0.0
    %816 = vmatprep.subr.mxu0 0.0
    %817 = vmatpush1.msra.mxu0 0.0
    %818 = vmatprep.subr.mxu0 0.0
    %819 = vmatpush1.msra.mxu0 0.0
    %820 = vmatprep.subr.mxu0 0.0
    %821 = vmatpush1.msra.mxu0 0.0
    %822 = vmatprep.subr.mxu0 0.0
    %823 = vmatpush1.msra.mxu0 0.0
    %824 = vmatprep.subr.mxu0 0.0
    %825 = vmatpush1.msra.mxu0 0.0
    %826 = vmatprep.subr.mxu0 0.0
    %827 = vmatpush1.msra.mxu0 0.0
    %828 = vmatprep.subr.mxu0 0.0
    %829 = vmatpush1.msra.mxu0 0.0
    %830 = vmatprep.subr.mxu0 0.0
    %831 = vmatpush1.msra.mxu0 0.0
    %832 = vmatprep.subr.mxu0 0.0
    %833 = vmatpush1.msra.mxu0 0.0
    %834 = vmatprep.subr.mxu0 0.0
    %835 = vmatpush1.msra.mxu0 0.0
    %836 = vmatprep.subr.mxu0 0.0
    %837 = vmatpush1.msra.mxu0 0.0
    %838 = vmatprep.subr.mxu0 0.0
    %839 = vmatpush1.msra.mxu0 0.0
    %840 = vmatprep.subr.mxu0 0.0
    %841 = vmatpush1.msra.mxu0 0.0
    %842 = vmatprep.subr.mxu0 0.0
    %843 = vmatpush1.msra.mxu0 0.0
    %844 = vmatprep.subr.mxu0 0.0
    %845 = vmatpush1.msra.mxu0 0.0
    %846 = vmatprep.subr.mxu0 0.0
    %847 = vmatpush1.msra.mxu0 0.0
    %848 = vmatprep.subr.mxu0 0.0
    %849 = vmatpush1.msra.mxu0 0.0
    %850 = vmatprep.subr.mxu0 0.0
    %851 = vmatpush1.msra.mxu0 0.0
    %852 = vmatprep.subr.mxu0 0.0
    %853 = vmatpush1.msra.mxu0 0.0
    %854 = vmatprep.subr.mxu0 0.0
    %855 = vmatpush1.msra.mxu0 0.0
    %856 = vmatprep.subr.mxu0 0.0
    %857 = vmatpush1.msra.mxu0 0.0
    %858 = vmatprep.subr.mxu0 0.0
    %859 = vmatpush1.msra.mxu0 0.0
    %860 = vmatprep.subr.mxu0 0.0
    %861 = vmatpush1.msra.mxu0 0.0
    %862 = vmatprep.subr.mxu0 0.0
    %863 = vmatpush1.msra.mxu0 0.0
    %864 = vmatprep.subr.mxu0 0.0
    %865 = vmatpush1.msra.mxu0 0.0
    %866 = vmatprep.subr.mxu0 0.0
    %867 = vmatpush1.msra.mxu0 0.0
    %868 = vmatprep.mubr.f32.mxu0 0.0
    %869 = vmatmul.mubr.f32.gmra.mrb[0].mxu0 %v802
    %v870 = vpop.f32.mrb[0].mxu0
    %v871 = vadd.f32 0.0, %v870
    %v872 = vpop.f32.mrb[0].mxu0
    %873 = vdwg.mxu0
    %v874 = vadd.f32 %v783, %v871
    %v875 = vtanh.pop %v874
    %v876 = vxor.u32 %v874, 2147483648
    %v877 = vmul.f32 %v876, 1.442695
    %v878 = vpow.pop %v877
    %v879 = vadd.f32 %v878, 1.0
    %v880 = vrcp.pop %v879
    %v881 = vmul.f32 1.0, %v880
    %v882 = vsel %vm799, %v875, %v881
    %v883 = vmul.f32 %v882, 0.0
    %885 = vrot.lane.b32.xlu0 %v882, 64
    %v886 = vpop.permute.xlu0 %885
    %v888 = vmul.f32 %v882, %v886
    %890 = vrot.lane.b32.xlu0 %v888, 32
    %v891 = vpop.permute.xlu0 %890
    %v893 = vadd.f32 %v883, %v891
    %v894 = vtanh.pop %v893
    %896 = vrot.lane.b32.xlu0 %v894, 64
    %v897 = vpop.permute.xlu0 %896
    %v899 = vmul.f32 %v882, %v897
    %901 = vrot.lane.b32.xlu0 %v899, 32
    %v902 = vpop.permute.xlu0 %901
    %v903 = vsel %vm800, %v902, 0
    %905 = vmatprep.subr.mxu0 0.0
    %906 = vmatpush1.msra.mxu0 %v791
    %907 = vmatprep.subr.mxu0 0.0
    %908 = vmatpush1.msra.mxu0 %v792
    %909 = vmatprep.subr.mxu0 0.0
    %910 = vmatpush1.msra.mxu0 %v793
    %911 = vmatprep.subr.mxu0 0.0
    %912 = vmatpush1.msra.mxu0 %v794
    %913 = vmatprep.subr.mxu0 0.0
    %914 = vmatpush1.msra.mxu0 0.0
    %915 = vmatprep.subr.mxu0 0.0
    %916 = vmatpush1.msra.mxu0 0.0
    %917 = vmatprep.subr.mxu0 0.0
    %918 = vmatpush1.msra.mxu0 0.0
    %919 = vmatprep.subr.mxu0 0.0
    %920 = vmatpush1.msra.mxu0 0.0
    %921 = vmatprep.subr.mxu0 0.0
    %922 = vmatpush1.msra.mxu0 0.0
    %923 = vmatprep.subr.mxu0 0.0
    %924 = vmatpush1.msra.mxu0 0.0
    %925 = vmatprep.subr.mxu0 0.0
    %926 = vmatpush1.msra.mxu0 0.0
    %927 = vmatprep.subr.mxu0 0.0
    %928 = vmatpush1.msra.mxu0 0.0
    %929 = vmatprep.subr.mxu0 0.0
    %930 = vmatpush1.msra.mxu0 0.0
    %931 = vmatprep.subr.mxu0 0.0
    %932 = vmatpush1.msra.mxu0 0.0
    %933 = vmatprep.subr.mxu0 0.0
    %934 = vmatpush1.msra.mxu0 0.0
    %935 = vmatprep.subr.mxu0 0.0
    %936 = vmatpush1.msra.mxu0 0.0
    %937 = vmatprep.subr.mxu0 0.0
    %938 = vmatpush1.msra.mxu0 0.0
    %939 = vmatprep.subr.mxu0 0.0
    %940 = vmatpush1.msra.mxu0 0.0
    %941 = vmatprep.subr.mxu0 0.0
    %942 = vmatpush1.msra.mxu0 0.0
    %943 = vmatprep.subr.mxu0 0.0
    %944 = vmatpush1.msra.mxu0 0.0
    %945 = vmatprep.subr.mxu0 0.0
    %946 = vmatpush1.msra.mxu0 0.0
    %947 = vmatprep.subr.mxu0 0.0
    %948 = vmatpush1.msra.mxu0 0.0
    %949 = vmatprep.subr.mxu0 0.0
    %950 = vmatpush1.msra.mxu0 0.0
    %951 = vmatprep.subr.mxu0 0.0
    %952 = vmatpush1.msra.mxu0 0.0
    %953 = vmatprep.subr.mxu0 0.0
    %954 = vmatpush1.msra.mxu0 0.0
    %955 = vmatprep.subr.mxu0 0.0
    %956 = vmatpush1.msra.mxu0 0.0
    %957 = vmatprep.subr.mxu0 0.0
    %958 = vmatpush1.msra.mxu0 0.0
    %959 = vmatprep.subr.mxu0 0.0
    %960 = vmatpush1.msra.mxu0 0.0
    %961 = vmatprep.subr.mxu0 0.0
    %962 = vmatpush1.msra.mxu0 0.0
    %963 = vmatprep.subr.mxu0 0.0
    %964 = vmatpush1.msra.mxu0 0.0
    %965 = vmatprep.subr.mxu0 0.0
    %966 = vmatpush1.msra.mxu0 0.0
    %967 = vmatprep.subr.mxu0 0.0
    %968 = vmatpush1.msra.mxu0 0.0
    %969 = vmatprep.mubr.f32.mxu0 0.0
    %970 = vmatmul.mubr.f32.gmra.mrb[0].mxu0 %v903
    %v971 = vpop.f32.mrb[0].mxu0
    %v972 = vadd.f32 0.0, %v971
    %v973 = vpop.f32.mrb[0].mxu0
    %974 = vdwg.mxu0
    %v976 = vrot.slane %v972, 6
    %v978 = vadd.f32 %v783, %v976
    %v979 = vtanh.pop %v978
    %v980 = vxor.u32 %v978, 2147483648
    %v981 = vmul.f32 %v980, 1.442695
    %v982 = vpow.pop %v981
    %v983 = vadd.f32 %v982, 1.0
    %v984 = vrcp.pop %v983
    %v985 = vmul.f32 1.0, %v984
    %v986 = vsel %vm799, %v979, %v985
    %v988 = vrot.slane %v893, 6
    %v990 = vmul.f32 %v986, %v988
    %992 = vrot.lane.b32.xlu0 %v986, 64
    %v993 = vpop.permute.xlu0 %992
    %v995 = vmul.f32 %v986, %v993
    %997 = vrot.lane.b32.xlu0 %v995, 32
    %v998 = vpop.permute.xlu0 %997
    %v1000 = vadd.f32 %v990, %v998
    %v1001 = vtanh.pop %v1000
    %1003 = vrot.lane.b32.xlu0 %v1001, 64
    %v1004 = vpop.permute.xlu0 %1003
    %v1006 = vmul.f32 %v986, %v1004
    %v1008 = vrot.slane %v1006, 2
    %1009 = vrot.lane.b32.xlu0 %v1008, 32
    %v1010 = vpop.permute.xlu0 %1009
    %v1011 = vsel %vm800, %v1010, 0
    %1013 = vmatprep.subr.mxu0 0.0
    %1014 = vmatpush1.msra.mxu0 %v791
    %1015 = vmatprep.subr.mxu0 0.0
    %1016 = vmatpush1.msra.mxu0 %v792
    %1017 = vmatprep.subr.mxu0 0.0
    %1018 = vmatpush1.msra.mxu0 %v793
    %1019 = vmatprep.subr.mxu0 0.0
    %1020 = vmatpush1.msra.mxu0 %v794
    %1021 = vmatprep.subr.mxu0 0.0
    %1022 = vmatpush1.msra.mxu0 0.0
    %1023 = vmatprep.subr.mxu0 0.0
    %1024 = vmatpush1.msra.mxu0 0.0
    %1025 = vmatprep.subr.mxu0 0.0
    %1026 = vmatpush1.msra.mxu0 0.0
    %1027 = vmatprep.subr.mxu0 0.0
    %1028 = vmatpush1.msra.mxu0 0.0
    %1029 = vmatprep.subr.mxu0 0.0
    %1030 = vmatpush1.msra.mxu0 0.0
    %1031 = vmatprep.subr.mxu0 0.0
    %1032 = vmatpush1.msra.mxu0 0.0
    %1033 = vmatprep.subr.mxu0 0.0
    %1034 = vmatpush1.msra.mxu0 0.0
    %1035 = vmatprep.subr.mxu0 0.0
    %1036 = vmatpush1.msra.mxu0 0.0
    %1037 = vmatprep.subr.mxu0 0.0
    %1038 = vmatpush1.msra.mxu0 0.0
    %1039 = vmatprep.subr.mxu0 0.0
    %1040 = vmatpush1.msra.mxu0 0.0
    %1041 = vmatprep.subr.mxu0 0.0
    %1042 = vmatpush1.msra.mxu0 0.0
    %1043 = vmatprep.subr.mxu0 0.0
    %1044 = vmatpush1.msra.mxu0 0.0
    %1045 = vmatprep.subr.mxu0 0.0
    %1046 = vmatpush1.msra.mxu0 0.0
    %1047 = vmatprep.subr.mxu0 0.0
    %1048 = vmatpush1.msra.mxu0 0.0
    %1049 = vmatprep.subr.mxu0 0.0
    %1050 = vmatpush1.msra.mxu0 0.0
    %1051 = vmatprep.subr.mxu0 0.0
    %1052 = vmatpush1.msra.mxu0 0.0
    %1053 = vmatprep.subr.mxu0 0.0
    %1054 = vmatpush1.msra.mxu0 0.0
    %1055 = vmatprep.subr.mxu0 0.0
    %1056 = vmatpush1.msra.mxu0 0.0
    %1057 = vmatprep.subr.mxu0 0.0
    %1058 = vmatpush1.msra.mxu0 0.0
    %1059 = vmatprep.subr.mxu0 0.0
    %1060 = vmatpush1.msra.mxu0 0.0
    %1061 = vmatprep.subr.mxu0 0.0
    %1062 = vmatpush1.msra.mxu0 0.0
    %1063 = vmatprep.subr.mxu0 0.0
    %1064 = vmatpush1.msra.mxu0 0.0
    %1065 = vmatprep.subr.mxu0 0.0
    %1066 = vmatpush1.msra.mxu0 0.0
    %1067 = vmatprep.subr.mxu0 0.0
    %1068 = vmatpush1.msra.mxu0 0.0
    %1069 = vmatprep.subr.mxu0 0.0
    %1070 = vmatpush1.msra.mxu0 0.0
    %1071 = vmatprep.subr.mxu0 0.0
    %1072 = vmatpush1.msra.mxu0 0.0
    %1073 = vmatprep.subr.mxu0 0.0
    %1074 = vmatpush1.msra.mxu0 0.0
    %1075 = vmatprep.subr.mxu0 0.0
    %1076 = vmatpush1.msra.mxu0 0.0
    %1077 = vmatprep.mubr.f32.mxu0 0.0
    %1078 = vmatmul.mubr.f32.gmra.mrb[0].mxu0 %v1011
    %v1079 = vpop.f32.mrb[0].mxu0
    %v1080 = vadd.f32 0.0, %v1079
    %v1081 = vpop.f32.mrb[0].mxu0
    %1082 = vdwg.mxu0
    %v1084 = vrot.slane %v1080, 4
    %v1086 = vadd.f32 %v783, %v1084
    %v1087 = vtanh.pop %v1086
    %v1088 = vxor.u32 %v1086, 2147483648
    %v1089 = vmul.f32 %v1088, 1.442695
    %v1090 = vpow.pop %v1089
    %v1091 = vadd.f32 %v1090, 1.0
    %v1092 = vrcp.pop %v1091
    %v1093 = vmul.f32 1.0, %v1092
    %v1094 = vsel %vm799, %v1087, %v1093
    %v1096 = vrot.slane %v1000, 6
    %v1098 = vmul.f32 %v1094, %v1096
    %1100 = vrot.lane.b32.xlu0 %v1094, 64
    %v1101 = vpop.permute.xlu0 %1100
    %v1103 = vmul.f32 %v1094, %v1101
    %1105 = vrot.lane.b32.xlu0 %v1103, 32
    %v1106 = vpop.permute.xlu0 %1105
    %v1108 = vadd.f32 %v1098, %v1106
    %v1109 = vtanh.pop %v1108
    %1111 = vrot.lane.b32.xlu0 %v1109, 64
    %v1112 = vpop.permute.xlu0 %1111
    %v1114 = vmul.f32 %v1094, %v1112
    %v1116 = vrot.slane %v1114, 4
    %1117 = vrot.lane.b32.xlu0 %v1116, 32
    %v1118 = vpop.permute.xlu0 %1117
    %v1119 = vsel %vm800, %v1118, 0
    %1121 = vmatprep.subr.mxu0 0.0
    %1122 = vmatpush1.msra.mxu0 %v791
    %1123 = vmatprep.subr.mxu0 0.0
    %1124 = vmatpush1.msra.mxu0 %v792
    %1125 = vmatprep.subr.mxu0 0.0
    %1126 = vmatpush1.msra.mxu0 %v793
    %1127 = vmatprep.subr.mxu0 0.0
    %1128 = vmatpush1.msra.mxu0 %v794
    %1129 = vmatprep.subr.mxu0 0.0
    %1130 = vmatpush1.msra.mxu0 0.0
    %1131 = vmatprep.subr.mxu0 0.0
    %1132 = vmatpush1.msra.mxu0 0.0
    %1133 = vmatprep.subr.mxu0 0.0
    %1134 = vmatpush1.msra.mxu0 0.0
    %1135 = vmatprep.subr.mxu0 0.0
    %1136 = vmatpush1.msra.mxu0 0.0
    %1137 = vmatprep.subr.mxu0 0.0
    %1138 = vmatpush1.msra.mxu0 0.0
    %1139 = vmatprep.subr.mxu0 0.0
    %1140 = vmatpush1.msra.mxu0 0.0
    %1141 = vmatprep.subr.mxu0 0.0
    %1142 = vmatpush1.msra.mxu0 0.0
    %1143 = vmatprep.subr.mxu0 0.0
    %1144 = vmatpush1.msra.mxu0 0.0
    %1145 = vmatprep.subr.mxu0 0.0
    %1146 = vmatpush1.msra.mxu0 0.0
    %1147 = vmatprep.subr.mxu0 0.0
    %1148 = vmatpush1.msra.mxu0 0.0
    %1149 = vmatprep.subr.mxu0 0.0
    %1150 = vmatpush1.msra.mxu0 0.0
    %1151 = vmatprep.subr.mxu0 0.0
    %1152 = vmatpush1.msra.mxu0 0.0
    %1153 = vmatprep.subr.mxu0 0.0
    %1154 = vmatpush1.msra.mxu0 0.0
    %1155 = vmatprep.subr.mxu0 0.0
    %1156 = vmatpush1.msra.mxu0 0.0
    %1157 = vmatprep.subr.mxu0 0.0
    %1158 = vmatpush1.msra.mxu0 0.0
    %1159 = vmatprep.subr.mxu0 0.0
    %1160 = vmatpush1.msra.mxu0 0.0
    %1161 = vmatprep.subr.mxu0 0.0
    %1162 = vmatpush1.msra.mxu0 0.0
    %1163 = vmatprep.subr.mxu0 0.0
    %1164 = vmatpush1.msra.mxu0 0.0
    %1165 = vmatprep.subr.mxu0 0.0
    %1166 = vmatpush1.msra.mxu0 0.0
    %1167 = vmatprep.subr.mxu0 0.0
    %1168 = vmatpush1.msra.mxu0 0.0
    %1169 = vmatprep.subr.mxu0 0.0
    %1170 = vmatpush1.msra.mxu0 0.0
    %1171 = vmatprep.subr.mxu0 0.0
    %1172 = vmatpush1.msra.mxu0 0.0
    %1173 = vmatprep.subr.mxu0 0.0
    %1174 = vmatpush1.msra.mxu0 0.0
    %1175 = vmatprep.subr.mxu0 0.0
    %1176 = vmatpush1.msra.mxu0 0.0
    %1177 = vmatprep.subr.mxu0 0.0
    %1178 = vmatpush1.msra.mxu0 0.0
    %1179 = vmatprep.subr.mxu0 0.0
    %1180 = vmatpush1.msra.mxu0 0.0
    %1181 = vmatprep.subr.mxu0 0.0
    %1182 = vmatpush1.msra.mxu0 0.0
    %1183 = vmatprep.subr.mxu0 0.0
    %1184 = vmatpush1.msra.mxu0 0.0
    %1185 = vmatprep.mubr.f32.mxu0 0.0
    %1186 = vmatmul.mubr.f32.gmra.mrb[0].mxu0 %v1119
    %v1187 = vpop.f32.mrb[0].mxu0
    %v1188 = vadd.f32 0.0, %v1187
    %v1189 = vpop.f32.mrb[0].mxu0
    %1190 = vdwg.mxu0
    %v1192 = vrot.slane %v1188, 2
    %v1194 = vadd.f32 %v783, %v1192
    %v1195 = vtanh.pop %v1194
    %v1196 = vxor.u32 %v1194, 2147483648
    %v1197 = vmul.f32 %v1196, 1.442695
    %v1198 = vpow.pop %v1197
    %v1199 = vadd.f32 %v1198, 1.0
    %v1200 = vrcp.pop %v1199
    %v1201 = vmul.f32 1.0, %v1200
    %v1202 = vsel %vm799, %v1195, %v1201
    %v1204 = vrot.slane %v1108, 6
    %v1206 = vmul.f32 %v1202, %v1204
    %1208 = vrot.lane.b32.xlu0 %v1202, 64
    %v1209 = vpop.permute.xlu0 %1208
    %v1211 = vmul.f32 %v1202, %v1209
    %1213 = vrot.lane.b32.xlu0 %v1211, 32
    %v1214 = vpop.permute.xlu0 %1213
    %v1216 = vadd.f32 %v1206, %v1214
    %v1217 = vtanh.pop %v1216
    %1219 = vrot.lane.b32.xlu0 %v1217, 64
    %v1220 = vpop.permute.xlu0 %1219
    %v1222 = vmul.f32 %v1202, %v1220
    %v1224 = vrot.slane %v1222, 6
    %1225 = vrot.lane.b32.xlu0 %v1224, 32
    %v1226 = vpop.permute.xlu0 %1225
    %v1227 = vsel %vm800, %v1226, 0
    %1229 = vmatprep.subr.mxu0 0.0
    %1230 = vmatpush1.msra.mxu0 %v791
    %1231 = vmatprep.subr.mxu0 0.0
    %1232 = vmatpush1.msra.mxu0 %v792
    %1233 = vmatprep.subr.mxu0 0.0
    %1234 = vmatpush1.msra.mxu0 %v793
    %1235 = vmatprep.subr.mxu0 0.0
    %1236 = vmatpush1.msra.mxu0 %v794
    %1237 = vmatprep.subr.mxu0 0.0
    %1238 = vmatpush1.msra.mxu0 0.0
    %1239 = vmatprep.subr.mxu0 0.0
    %1240 = vmatpush1.msra.mxu0 0.0
    %1241 = vmatprep.subr.mxu0 0.0
    %1242 = vmatpush1.msra.mxu0 0.0
    %1243 = vmatprep.subr.mxu0 0.0
    %1244 = vmatpush1.msra.mxu0 0.0
    %1245 = vmatprep.subr.mxu0 0.0
    %1246 = vmatpush1.msra.mxu0 0.0
    %1247 = vmatprep.subr.mxu0 0.0
    %1248 = vmatpush1.msra.mxu0 0.0
    %1249 = vmatprep.subr.mxu0 0.0
    %1250 = vmatpush1.msra.mxu0 0.0
    %1251 = vmatprep.subr.mxu0 0.0
    %1252 = vmatpush1.msra.mxu0 0.0
    %1253 = vmatprep.subr.mxu0 0.0
    %1254 = vmatpush1.msra.mxu0 0.0
    %1255 = vmatprep.subr.mxu0 0.0
    %1256 = vmatpush1.msra.mxu0 0.0
    %1257 = vmatprep.subr.mxu0 0.0
    %1258 = vmatpush1.msra.mxu0 0.0
    %1259 = vmatprep.subr.mxu0 0.0
    %1260 = vmatpush1.msra.mxu0 0.0
    %1261 = vmatprep.subr.mxu0 0.0
    %1262 = vmatpush1.msra.mxu0 0.0
    %1263 = vmatprep.subr.mxu0 0.0
    %1264 = vmatpush1.msra.mxu0 0.0
    %1265 = vmatprep.subr.mxu0 0.0
    %1266 = vmatpush1.msra.mxu0 0.0
    %1267 = vmatprep.subr.mxu0 0.0
    %1268 = vmatpush1.msra.mxu0 0.0
    %1269 = vmatprep.subr.mxu0 0.0
    %1270 = vmatpush1.msra.mxu0 0.0
    %1271 = vmatprep.subr.mxu0 0.0
    %1272 = vmatpush1.msra.mxu0 0.0
    %1273 = vmatprep.subr.mxu0 0.0
    %1274 = vmatpush1.msra.mxu0 0.0
    %1275 = vmatprep.subr.mxu0 0.0
    %1276 = vmatpush1.msra.mxu0 0.0
    %1277 = vmatprep.subr.mxu0 0.0
    %1278 = vmatpush1.msra.mxu0 0.0
    %1279 = vmatprep.subr.mxu0 0.0
    %1280 = vmatpush1.msra.mxu0 0.0
    %1281 = vmatprep.subr.mxu0 0.0
    %1282 = vmatpush1.msra.mxu0 0.0
    %1283 = vmatprep.subr.mxu0 0.0
    %1284 = vmatpush1.msra.mxu0 0.0
    %1285 = vmatprep.subr.mxu0 0.0
    %1286 = vmatpush1.msra.mxu0 0.0
    %1287 = vmatprep.subr.mxu0 0.0
    %1288 = vmatpush1.msra.mxu0 0.0
    %1289 = vmatprep.subr.mxu0 0.0
    %1290 = vmatpush1.msra.mxu0 0.0
    %1291 = vmatprep.subr.mxu0 0.0
    %1292 = vmatpush1.msra.mxu0 0.0
    %1293 = vmatprep.mubr.f32.mxu0 0.0
    %1294 = vmatmul.mubr.f32.gmra.mrb[0].mxu0 %v1227
    %v1295 = vpop.f32.mrb[0].mxu0
    %v1296 = vadd.f32 0.0, %v1295
    %v1297 = vpop.f32.mrb[0].mxu0
    %1298 = vdwg.mxu0
    %v1299 = vadd.f32 %v788, %v1296
    %v1300 = vtanh.pop %v1299
    %v1301 = vxor.u32 %v1299, 2147483648
    %v1302 = vmul.f32 %v1301, 1.442695
    %v1303 = vpow.pop %v1302
    %v1304 = vadd.f32 %v1303, 1.0
    %v1305 = vrcp.pop %v1304
    %v1306 = vmul.f32 1.0, %v1305
    %v1307 = vsel %vm799, %v1300, %v1306
    %v1309 = vrot.slane %v1216, 6
    %v1311 = vmul.f32 %v1307, %v1309
    %1313 = vrot.lane.b32.xlu0 %v1307, 64
    %v1314 = vpop.permute.xlu0 %1313
    %v1316 = vmul.f32 %v1307, %v1314
    %1318 = vrot.lane.b32.xlu0 %v1316, 32
    %v1319 = vpop.permute.xlu0 %1318
    %v1321 = vadd.f32 %v1311, %v1319
    %v1322 = vtanh.pop %v1321
    %1324 = vrot.lane.b32.xlu0 %v1322, 64
    %v1325 = vpop.permute.xlu0 %1324
    %v1327 = vmul.f32 %v1307, %v1325
    %1329 = vrot.lane.b32.xlu0 %v1327, 32
    %v1330 = vpop.permute.xlu0 %1329
    %v1331 = vsel %vm800, %v1330, 0
    %1333 = vmatprep.subr.mxu0 0.0
    %1334 = vmatpush1.msra.mxu0 %v791
    %1335 = vmatprep.subr.mxu0 0.0
    %1336 = vmatpush1.msra.mxu0 %v792
    %1337 = vmatprep.subr.mxu0 0.0
    %1338 = vmatpush1.msra.mxu0 %v793
    %1339 = vmatprep.subr.mxu0 0.0
    %1340 = vmatpush1.msra.mxu0 %v794
    %1341 = vmatprep.subr.mxu0 0.0
    %1342 = vmatpush1.msra.mxu0 0.0
    %1343 = vmatprep.subr.mxu0 0.0
    %1344 = vmatpush1.msra.mxu0 0.0
    %1345 = vmatprep.subr.mxu0 0.0
    %1346 = vmatpush1.msra.mxu0 0.0
    %1347 = vmatprep.subr.mxu0 0.0
    %1348 = vmatpush1.msra.mxu0 0.0
    %1349 = vmatprep.subr.mxu0 0.0
    %1350 = vmatpush1.msra.mxu0 0.0
    %1351 = vmatprep.subr.mxu0 0.0
    %1352 = vmatpush1.msra.mxu0 0.0
    %1353 = vmatprep.subr.mxu0 0.0
    %1354 = vmatpush1.msra.mxu0 0.0
    %1355 = vmatprep.subr.mxu0 0.0
    %1356 = vmatpush1.msra.mxu0 0.0
    %1357 = vmatprep.subr.mxu0 0.0
    %1358 = vmatpush1.msra.mxu0 0.0
    %1359 = vmatprep.subr.mxu0 0.0
    %1360 = vmatpush1.msra.mxu0 0.0
    %1361 = vmatprep.subr.mxu0 0.0
    %1362 = vmatpush1.msra.mxu0 0.0
    %1363 = vmatprep.subr.mxu0 0.0
    %1364 = vmatpush1.msra.mxu0 0.0
    %1365 = vmatprep.subr.mxu0 0.0
    %1366 = vmatpush1.msra.mxu0 0.0
    %1367 = vmatprep.subr.mxu0 0.0
    %1368 = vmatpush1.msra.mxu0 0.0
    %1369 = vmatprep.subr.mxu0 0.0
    %1370 = vmatpush1.msra.mxu0 0.0
    %1371 = vmatprep.subr.mxu0 0.0
    %1372 = vmatpush1.msra.mxu0 0.0
    %1373 = vmatprep.subr.mxu0 0.0
    %1374 = vmatpush1.msra.mxu0 0.0
    %1375 = vmatprep.subr.mxu0 0.0
    %1376 = vmatpush1.msra.mxu0 0.0
    %1377 = vmatprep.subr.mxu0 0.0
    %1378 = vmatpush1.msra.mxu0 0.0
    %1379 = vmatprep.subr.mxu0 0.0
    %1380 = vmatpush1.msra.mxu0 0.0
    %1381 = vmatprep.subr.mxu0 0.0
    %1382 = vmatpush1.msra.mxu0 0.0
    %1383 = vmatprep.subr.mxu0 0.0
    %1384 = vmatpush1.msra.mxu0 0.0
    %1385 = vmatprep.subr.mxu0 0.0
    %1386 = vmatpush1.msra.mxu0 0.0
    %1387 = vmatprep.subr.mxu0 0.0
    %1388 = vmatpush1.msra.mxu0 0.0
    %1389 = vmatprep.subr.mxu0 0.0
    %1390 = vmatpush1.msra.mxu0 0.0
    %1391 = vmatprep.subr.mxu0 0.0
    %1392 = vmatpush1.msra.mxu0 0.0
    %1393 = vmatprep.subr.mxu0 0.0
    %1394 = vmatpush1.msra.mxu0 0.0
    %1395 = vmatprep.subr.mxu0 0.0
    %1396 = vmatpush1.msra.mxu0 0.0
    %1397 = vmatprep.mubr.f32.mxu0 0.0
    %1398 = vmatmul.mubr.f32.gmra.mrb[0].mxu0 %v1331
    %v1399 = vpop.f32.mrb[0].mxu0
    %v1400 = vadd.f32 0.0, %v1399
    %v1401 = vpop.f32.mrb[0].mxu0
    %1402 = vdwg.mxu0
    %v1404 = vrot.slane %v1400, 6
    %v1406 = vadd.f32 %v788, %v1404
    %v1407 = vtanh.pop %v1406
    %v1408 = vxor.u32 %v1406, 2147483648
    %v1409 = vmul.f32 %v1408, 1.442695
    %v1410 = vpow.pop %v1409
    %v1411 = vadd.f32 %v1410, 1.0
    %v1412 = vrcp.pop %v1411
    %v1413 = vmul.f32 1.0, %v1412
    %v1414 = vsel %vm799, %v1407, %v1413
    %v1416 = vrot.slane %v1321, 6
    %v1418 = vmul.f32 %v1414, %v1416
    %1420 = vrot.lane.b32.xlu0 %v1414, 64
    %v1421 = vpop.permute.xlu0 %1420
    %v1423 = vmul.f32 %v1414, %v1421
    %1425 = vrot.lane.b32.xlu0 %v1423, 32
    %v1426 = vpop.permute.xlu0 %1425
    %v1428 = vadd.f32 %v1418, %v1426
    %v1429 = vtanh.pop %v1428
    %1431 = vrot.lane.b32.xlu0 %v1429, 64
    %v1432 = vpop.permute.xlu0 %1431
    %v1434 = vmul.f32 %v1414, %v1432
    %v1436 = vrot.slane %v1434, 2
    %1437 = vrot.lane.b32.xlu0 %v1436, 32
    %v1438 = vpop.permute.xlu0 %1437
    %v1439 = vsel %vm800, %v1438, 0
    %1441 = vmatprep.subr.mxu0 0.0
    %1442 = vmatpush1.msra.mxu0 %v791
    %1443 = vmatprep.subr.mxu0 0.0
    %1444 = vmatpush1.msra.mxu0 %v792
    %1445 = vmatprep.subr.mxu0 0.0
    %1446 = vmatpush1.msra.mxu0 %v793
    %1447 = vmatprep.subr.mxu0 0.0
    %1448 = vmatpush1.msra.mxu0 %v794
    %1449 = vmatprep.subr.mxu0 0.0
    %1450 = vmatpush1.msra.mxu0 0.0
    %1451 = vmatprep.subr.mxu0 0.0
    %1452 = vmatpush1.msra.mxu0 0.0
    %1453 = vmatprep.subr.mxu0 0.0
    %1454 = vmatpush1.msra.mxu0 0.0
    %1455 = vmatprep.subr.mxu0 0.0
    %1456 = vmatpush1.msra.mxu0 0.0
    %1457 = vmatprep.subr.mxu0 0.0
    %1458 = vmatpush1.msra.mxu0 0.0
    %1459 = vmatprep.subr.mxu0 0.0
    %1460 = vmatpush1.msra.mxu0 0.0
    %1461 = vmatprep.subr.mxu0 0.0
    %1462 = vmatpush1.msra.mxu0 0.0
    %1463 = vmatprep.subr.mxu0 0.0
    %1464 = vmatpush1.msra.mxu0 0.0
    %1465 = vmatprep.subr.mxu0 0.0
    %1466 = vmatpush1.msra.mxu0 0.0
    %1467 = vmatprep.subr.mxu0 0.0
    %1468 = vmatpush1.msra.mxu0 0.0
    %1469 = vmatprep.subr.mxu0 0.0
    %1470 = vmatpush1.msra.mxu0 0.0
    %1471 = vmatprep.subr.mxu0 0.0
    %1472 = vmatpush1.msra.mxu0 0.0
    %1473 = vmatprep.subr.mxu0 0.0
    %1474 = vmatpush1.msra.mxu0 0.0
    %1475 = vmatprep.subr.mxu0 0.0
    %1476 = vmatpush1.msra.mxu0 0.0
    %1477 = vmatprep.subr.mxu0 0.0
    %1478 = vmatpush1.msra.mxu0 0.0
    %1479 = vmatprep.subr.mxu0 0.0
    %1480 = vmatpush1.msra.mxu0 0.0
    %1481 = vmatprep.subr.mxu0 0.0
    %1482 = vmatpush1.msra.mxu0 0.0
    %1483 = vmatprep.subr.mxu0 0.0
    %1484 = vmatpush1.msra.mxu0 0.0
    %1485 = vmatprep.subr.mxu0 0.0
    %1486 = vmatpush1.msra.mxu0 0.0
    %1487 = vmatprep.subr.mxu0 0.0
    %1488 = vmatpush1.msra.mxu0 0.0
    %1489 = vmatprep.subr.mxu0 0.0
    %1490 = vmatpush1.msra.mxu0 0.0
    %1491 = vmatprep.subr.mxu0 0.0
    %1492 = vmatpush1.msra.mxu0 0.0
    %1493 = vmatprep.subr.mxu0 0.0
    %1494 = vmatpush1.msra.mxu0 0.0
    %1495 = vmatprep.subr.mxu0 0.0
    %1496 = vmatpush1.msra.mxu0 0.0
    %1497 = vmatprep.subr.mxu0 0.0
    %1498 = vmatpush1.msra.mxu0 0.0
    %1499 = vmatprep.subr.mxu0 0.0
    %1500 = vmatpush1.msra.mxu0 0.0
    %1501 = vmatprep.subr.mxu0 0.0
    %1502 = vmatpush1.msra.mxu0 0.0
    %1503 = vmatprep.subr.mxu0 0.0
    %1504 = vmatpush1.msra.mxu0 0.0
    %1505 = vmatprep.mubr.f32.mxu0 0.0
    %1506 = vmatmul.mubr.f32.gmra.mrb[0].mxu0 %v1439
    %v1507 = vpop.f32.mrb[0].mxu0
    %v1508 = vadd.f32 0.0, %v1507
    %v1509 = vpop.f32.mrb[0].mxu0
    %1510 = vdwg.mxu0
    %v1512 = vrot.slane %v1508, 4
    %v1514 = vadd.f32 %v788, %v1512
    %v1515 = vtanh.pop %v1514
    %v1516 = vxor.u32 %v1514, 2147483648
    %v1517 = vmul.f32 %v1516, 1.442695
    %v1518 = vpow.pop %v1517
    %v1519 = vadd.f32 %v1518, 1.0
    %v1520 = vrcp.pop %v1519
    %v1521 = vmul.f32 1.0, %v1520
    %v1522 = vsel %vm799, %v1515, %v1521
    %v1524 = vrot.slane %v1428, 6
    %v1526 = vmul.f32 %v1522, %v1524
    %1528 = vrot.lane.b32.xlu0 %v1522, 64
    %v1529 = vpop.permute.xlu0 %1528
    %v1531 = vmul.f32 %v1522, %v1529
    %1533 = vrot.lane.b32.xlu0 %v1531, 32
    %v1534 = vpop.permute.xlu0 %1533
    %v1536 = vadd.f32 %v1526, %v1534
    %v1537 = vtanh.pop %v1536
    %1539 = vrot.lane.b32.xlu0 %v1537, 64
    %v1540 = vpop.permute.xlu0 %1539
    %v1542 = vmul.f32 %v1522, %v1540
    %v1544 = vrot.slane %v1542, 4
    %1545 = vrot.lane.b32.xlu0 %v1544, 32
    %v1546 = vpop.permute.xlu0 %1545
    %v1547 = vsel %vm800, %v1546, 0
    %1549 = vmatprep.subr.mxu0 0.0
    %1550 = vmatpush1.msra.mxu0 %v791
    %1551 = vmatprep.subr.mxu0 0.0
    %1552 = vmatpush1.msra.mxu0 %v792
    %1553 = vmatprep.subr.mxu0 0.0
    %1554 = vmatpush1.msra.mxu0 %v793
    %1555 = vmatprep.subr.mxu0 0.0
    %1556 = vmatpush1.msra.mxu0 %v794
    %1557 = vmatprep.subr.mxu0 0.0
    %1558 = vmatpush1.msra.mxu0 0.0
    %1559 = vmatprep.subr.mxu0 0.0
    %1560 = vmatpush1.msra.mxu0 0.0
    %1561 = vmatprep.subr.mxu0 0.0
    %1562 = vmatpush1.msra.mxu0 0.0
    %1563 = vmatprep.subr.mxu0 0.0
    %1564 = vmatpush1.msra.mxu0 0.0
    %1565 = vmatprep.subr.mxu0 0.0
    %1566 = vmatpush1.msra.mxu0 0.0
    %1567 = vmatprep.subr.mxu0 0.0
    %1568 = vmatpush1.msra.mxu0 0.0
    %1569 = vmatprep.subr.mxu0 0.0
    %1570 = vmatpush1.msra.mxu0 0.0
    %1571 = vmatprep.subr.mxu0 0.0
    %1572 = vmatpush1.msra.mxu0 0.0
    %1573 = vmatprep.subr.mxu0 0.0
    %1574 = vmatpush1.msra.mxu0 0.0
    %1575 = vmatprep.subr.mxu0 0.0
    %1576 = vmatpush1.msra.mxu0 0.0
    %1577 = vmatprep.subr.mxu0 0.0
    %1578 = vmatpush1.msra.mxu0 0.0
    %1579 = vmatprep.subr.mxu0 0.0
    %1580 = vmatpush1.msra.mxu0 0.0
    %1581 = vmatprep.subr.mxu0 0.0
    %1582 = vmatpush1.msra.mxu0 0.0
    %1583 = vmatprep.subr.mxu0 0.0
    %1584 = vmatpush1.msra.mxu0 0.0
    %1585 = vmatprep.subr.mxu0 0.0
    %1586 = vmatpush1.msra.mxu0 0.0
    %1587 = vmatprep.subr.mxu0 0.0
    %1588 = vmatpush1.msra.mxu0 0.0
    %1589 = vmatprep.subr.mxu0 0.0
    %1590 = vmatpush1.msra.mxu0 0.0
    %1591 = vmatprep.subr.mxu0 0.0
    %1592 = vmatpush1.msra.mxu0 0.0
    %1593 = vmatprep.subr.mxu0 0.0
    %1594 = vmatpush1.msra.mxu0 0.0
    %1595 = vmatprep.subr.mxu0 0.0
    %1596 = vmatpush1.msra.mxu0 0.0
    %1597 = vmatprep.subr.mxu0 0.0
    %1598 = vmatpush1.msra.mxu0 0.0
    %1599 = vmatprep.subr.mxu0 0.0
    %1600 = vmatpush1.msra.mxu0 0.0
    %1601 = vmatprep.subr.mxu0 0.0
    %1602 = vmatpush1.msra.mxu0 0.0
    %1603 = vmatprep.subr.mxu0 0.0
    %1604 = vmatpush1.msra.mxu0 0.0
    %1605 = vmatprep.subr.mxu0 0.0
    %1606 = vmatpush1.msra.mxu0 0.0
    %1607 = vmatprep.subr.mxu0 0.0
    %1608 = vmatpush1.msra.mxu0 0.0
    %1609 = vmatprep.subr.mxu0 0.0
    %1610 = vmatpush1.msra.mxu0 0.0
    %1611 = vmatprep.subr.mxu0 0.0
    %1612 = vmatpush1.msra.mxu0 0.0
    %1613 = vmatprep.mubr.f32.mxu0 0.0
    %1614 = vmatmul.mubr.f32.gmra.mrb[0].mxu0 %v1547
    %v1615 = vpop.f32.mrb[0].mxu0
    %v1616 = vadd.f32 0.0, %v1615
    %v1617 = vpop.f32.mrb[0].mxu0
    %1618 = vdwg.mxu0
    %v1620 = vrot.slane %v1616, 2
    %v1622 = vadd.f32 %v788, %v1620
    %v1623 = vtanh.pop %v1622
    %v1624 = vxor.u32 %v1622, 2147483648
    %v1625 = vmul.f32 %v1624, 1.442695
    %v1626 = vpow.pop %v1625
    %v1627 = vadd.f32 %v1626, 1.0
    %v1628 = vrcp.pop %v1627
    %v1629 = vmul.f32 1.0, %v1628
    %v1630 = vsel %vm799, %v1623, %v1629
    %v1632 = vrot.slane %v1536, 6
    %v1634 = vmul.f32 %v1630, %v1632
    %1636 = vrot.lane.b32.xlu0 %v1630, 64
    %v1637 = vpop.permute.xlu0 %1636
    %v1639 = vmul.f32 %v1630, %v1637
    %1641 = vrot.lane.b32.xlu0 %v1639, 32
    %v1642 = vpop.permute.xlu0 %1641
    %v1644 = vadd.f32 %v1634, %v1642
    %v1645 = vtanh.pop %v1644
    %1647 = vrot.lane.b32.xlu0 %v1645, 64
    %v1648 = vpop.permute.xlu0 %1647
    %v1650 = vmul.f32 %v1630, %v1648
    %v1651 = vld [vmem:[%s8] sm:$0xff]
    %v1652 = vld [vmem:[%s8 + $0x8] sm:$0xff]
    %v1653 = vld [vmem:[%s8 + $0x10] sm:$0xff]
    %v1654 = vld [vmem:[%s8 + $0x18] sm:$0xff]
    %v1655 = vld [vmem:[%s9] sm:$0x1]
    %v1657 = vlaneseq
    %v1658 = vshrl.u32 %v1657, 7
    %v1659 = vsub.s32 0, %v1658
    %v1660 = vrot.slane %v1655, %v1659
    %v1663 = vrot.slane %v1650, 6
    %1664 = vrot.lane.b32.xlu0 %v1663, 32
    %v1665 = vpop.permute.xlu0 %1664
    %v1666 = vsel %vm800, %v1665, 0
    %1668 = vmatprep.subr.mxu0 0.0
    %1669 = vmatpush1.msra.mxu0 %v1651
    %1670 = vmatprep.subr.mxu0 0.0
    %1671 = vmatpush1.msra.mxu0 %v1652
    %1672 = vmatprep.subr.mxu0 0.0
    %1673 = vmatpush1.msra.mxu0 %v1653
    %1674 = vmatprep.subr.mxu0 0.0
    %1675 = vmatpush1.msra.mxu0 %v1654
    %1676 = vmatprep.subr.mxu0 0.0
    %1677 = vmatpush1.msra.mxu0 0.0
    %1678 = vmatprep.subr.mxu0 0.0
    %1679 = vmatpush1.msra.mxu0 0.0
    %1680 = vmatprep.subr.mxu0 0.0
    %1681 = vmatpush1.msra.mxu0 0.0
    %1682 = vmatprep.subr.mxu0 0.0
    %1683 = vmatpush1.msra.mxu0 0.0
    %1684 = vmatprep.subr.mxu0 0.0
    %1685 = vmatpush1.msra.mxu0 0.0
    %1686 = vmatprep.subr.mxu0 0.0
    %1687 = vmatpush1.msra.mxu0 0.0
    %1688 = vmatprep.subr.mxu0 0.0
    %1689 = vmatpush1.msra.mxu0 0.0
    %1690 = vmatprep.subr.mxu0 0.0
    %1691 = vmatpush1.msra.mxu0 0.0
    %1692 = vmatprep.subr.mxu0 0.0
    %1693 = vmatpush1.msra.mxu0 0.0
    %1694 = vmatprep.subr.mxu0 0.0
    %1695 = vmatpush1.msra.mxu0 0.0
    %1696 = vmatprep.subr.mxu0 0.0
    %1697 = vmatpush1.msra.mxu0 0.0
    %1698 = vmatprep.subr.mxu0 0.0
    %1699 = vmatpush1.msra.mxu0 0.0
    %1700 = vmatprep.subr.mxu0 0.0
    %1701 = vmatpush1.msra.mxu0 0.0
    %1702 = vmatprep.subr.mxu0 0.0
    %1703 = vmatpush1.msra.mxu0 0.0
    %1704 = vmatprep.subr.mxu0 0.0
    %1705 = vmatpush1.msra.mxu0 0.0
    %1706 = vmatprep.subr.mxu0 0.0
    %1707 = vmatpush1.msra.mxu0 0.0
    %1708 = vmatprep.subr.mxu0 0.0
    %1709 = vmatpush1.msra.mxu0 0.0
    %1710 = vmatprep.subr.mxu0 0.0
    %1711 = vmatpush1.msra.mxu0 0.0
    %1712 = vmatprep.subr.mxu0 0.0
    %1713 = vmatpush1.msra.mxu0 0.0
    %1714 = vmatprep.subr.mxu0 0.0
    %1715 = vmatpush1.msra.mxu0 0.0
    %1716 = vmatprep.subr.mxu0 0.0
    %1717 = vmatpush1.msra.mxu0 0.0
    %1718 = vmatprep.subr.mxu0 0.0
    %1719 = vmatpush1.msra.mxu0 0.0
    %1720 = vmatprep.subr.mxu0 0.0
    %1721 = vmatpush1.msra.mxu0 0.0
    %1722 = vmatprep.subr.mxu0 0.0
    %1723 = vmatpush1.msra.mxu0 0.0
    %1724 = vmatprep.subr.mxu0 0.0
    %1725 = vmatpush1.msra.mxu0 0.0
    %1726 = vmatprep.subr.mxu0 0.0
    %1727 = vmatpush1.msra.mxu0 0.0
    %1728 = vmatprep.subr.mxu0 0.0
    %1729 = vmatpush1.msra.mxu0 0.0
    %1730 = vmatprep.subr.mxu0 0.0
    %1731 = vmatpush1.msra.mxu0 0.0
    %1732 = vmatprep.mubr.f32.mxu0 0.0
    %1733 = vmatmul.mubr.f32.gmra.mrb[0].mxu0 %v1666
    %v1734 = vpop.f32.mrb[0].mxu0
    %v1735 = vadd.f32 %v1660, %v1734
    %v1736 = vpop.f32.mrb[0].mxu0
    %1737 = vdwg.mxu0
    %v1739 = vrot.slane %v694, 7
    %vm1741 = vcmask 1040384
    %v1742 = vsel %vm1741, %v373, %v1739
    %v1743 = vld [vmem:[%s7] sm:$0xff]
    %v1744 = vld [vmem:[%s7 + $0x8] sm:$0xff]
    %v1745 = vld [vmem:[%s7 + $0x10] sm:$0xff]
    %v1746 = vld [vmem:[%s7 + $0x18] sm:$0xff]
    %v1747 = vld [vmem:[%s7 + $0x20] sm:$0xff]
    %v1748 = vld [vmem:[%s7 + $0x28] sm:$0xff]
    %v1749 = vld [vmem:[%s7 + $0x30] sm:$0xff]
    %v1750 = vld [vmem:[%s7 + $0x38] sm:$0xff]
    %vm1751 = vcmask 523264
    %v1753 = vsel %vm1751, %v1742, 0
    %1755 = vmatprep.subr.mxu0 0.0
    %1756 = vmatpush1.msra.mxu0 %v1743
    %1757 = vmatprep.subr.mxu0 0.0
    %1758 = vmatpush1.msra.mxu0 %v1744
    %1759 = vmatprep.subr.mxu0 0.0
    %1760 = vmatpush1.msra.mxu0 %v1745
    %1761 = vmatprep.subr.mxu0 0.0
    %1762 = vmatpush1.msra.mxu0 %v1746
    %1763 = vmatprep.subr.mxu0 0.0
    %1764 = vmatpush1.msra.mxu0 %v1747
    %1765 = vmatprep.subr.mxu0 0.0
    %1766 = vmatpush1.msra.mxu0 %v1748
    %1767 = vmatprep.subr.mxu0 0.0
    %1768 = vmatpush1.msra.mxu0 %v1749
    %1769 = vmatprep.subr.mxu0 0.0
    %1770 = vmatpush1.msra.mxu0 %v1750
    %1771 = vmatprep.subr.mxu0 0.0
    %1772 = vmatpush1.msra.mxu0 0.0
    %1773 = vmatprep.subr.mxu0 0.0
    %1774 = vmatpush1.msra.mxu0 0.0
    %1775 = vmatprep.subr.mxu0 0.0
    %1776 = vmatpush1.msra.mxu0 0.0
    %1777 = vmatprep.subr.mxu0 0.0
    %1778 = vmatpush1.msra.mxu0 0.0
    %1779 = vmatprep.subr.mxu0 0.0
    %1780 = vmatpush1.msra.mxu0 0.0
    %1781 = vmatprep.subr.mxu0 0.0
    %1782 = vmatpush1.msra.mxu0 0.0
    %1783 = vmatprep.subr.mxu0 0.0
    %1784 = vmatpush1.msra.mxu0 0.0
    %1785 = vmatprep.subr.mxu0 0.0
    %1786 = vmatpush1.msra.mxu0 0.0
    %1787 = vmatprep.subr.mxu0 0.0
    %1788 = vmatpush1.msra.mxu0 0.0
    %1789 = vmatprep.subr.mxu0 0.0
    %1790 = vmatpush1.msra.mxu0 0.0
    %1791 = vmatprep.subr.mxu0 0.0
    %1792 = vmatpush1.msra.mxu0 0.0
    %1793 = vmatprep.subr.mxu0 0.0
    %1794 = vmatpush1.msra.mxu0 0.0
    %1795 = vmatprep.subr.mxu0 0.0
    %1796 = vmatpush1.msra.mxu0 0.0
    %1797 = vmatprep.subr.mxu0 0.0
    %1798 = vmatpush1.msra.mxu0 0.0
    %1799 = vmatprep.subr.mxu0 0.0
    %1800 = vmatpush1.msra.mxu0 0.0
    %1801 = vmatprep.subr.mxu0 0.0
    %1802 = vmatpush1.msra.mxu0 0.0
    %1803 = vmatprep.subr.mxu0 0.0
    %1804 = vmatpush1.msra.mxu0 0.0
    %1805 = vmatprep.subr.mxu0 0.0
    %1806 = vmatpush1.msra.mxu0 0.0
    %1807 = vmatprep.subr.mxu0 0.0
    %1808 = vmatpush1.msra.mxu0 0.0
    %1809 = vmatprep.subr.mxu0 0.0
    %1810 = vmatpush1.msra.mxu0 0.0
    %1811 = vmatprep.subr.mxu0 0.0
    %1812 = vmatpush1.msra.mxu0 0.0
    %1813 = vmatprep.subr.mxu0 0.0
    %1814 = vmatpush1.msra.mxu0 0.0
    %1815 = vmatprep.subr.mxu0 0.0
    %1816 = vmatpush1.msra.mxu0 0.0
    %1817 = vmatprep.subr.mxu0 0.0
    %1818 = vmatpush1.msra.mxu0 0.0
    %1819 = vmatprep.mubr.f32.mxu0 0.0
    %1820 = vmatmul.mubr.f32.gmra.mrb[0].mxu0 %v1753
    %v1821 = vpop.f32.mrb[0].mxu0
    %v1822 = vadd.f32 0.0, %v1821
    %v1823 = vpop.f32.mrb[0].mxu0
    %1824 = vdwg.mxu0
    %v1825 = vadd.f32 %v1735, %v1822
    %v1827 = vrot.slane %v373, 1
    %v1829 = vsel %vm1741, %v1827, %v694
    %s1830 = scalar_lea.vmem %s7, 64
    %v1831 = vld [vmem:[%s1830] sm:$0xff]
    %v1832 = vld [vmem:[%s1830 + $0x8] sm:$0xff]
    %v1833 = vld [vmem:[%s1830 + $0x10] sm:$0xff]
    %v1834 = vld [vmem:[%s1830 + $0x18] sm:$0xff]
    %v1835 = vld [vmem:[%s1830 + $0x20] sm:$0xff]
    %v1836 = vld [vmem:[%s1830 + $0x28] sm:$0xff]
    %v1837 = vld [vmem:[%s1830 + $0x30] sm:$0xff]
    %v1838 = vld [vmem:[%s1830 + $0x38] sm:$0xff]
    %v1840 = vsel %vm1751, %v1829, 0
    %1842 = vmatprep.subr.mxu0 0.0
    %1843 = vmatpush1.msra.mxu0 %v1831
    %1844 = vmatprep.subr.mxu0 0.0
    %1845 = vmatpush1.msra.mxu0 %v1832
    %1846 = vmatprep.subr.mxu0 0.0
    %1847 = vmatpush1.msra.mxu0 %v1833
    %1848 = vmatprep.subr.mxu0 0.0
    %1849 = vmatpush1.msra.mxu0 %v1834
    %1850 = vmatprep.subr.mxu0 0.0
    %1851 = vmatpush1.msra.mxu0 %v1835
    %1852 = vmatprep.subr.mxu0 0.0
    %1853 = vmatpush1.msra.mxu0 %v1836
    %1854 = vmatprep.subr.mxu0 0.0
    %1855 = vmatpush1.msra.mxu0 %v1837
    %1856 = vmatprep.subr.mxu0 0.0
    %1857 = vmatpush1.msra.mxu0 %v1838
    %1858 = vmatprep.subr.mxu0 0.0
    %1859 = vmatpush1.msra.mxu0 0.0
    %1860 = vmatprep.subr.mxu0 0.0
    %1861 = vmatpush1.msra.mxu0 0.0
    %1862 = vmatprep.subr.mxu0 0.0
    %1863 = vmatpush1.msra.mxu0 0.0
    %1864 = vmatprep.subr.mxu0 0.0
    %1865 = vmatpush1.msra.mxu0 0.0
    %1866 = vmatprep.subr.mxu0 0.0
    %1867 = vmatpush1.msra.mxu0 0.0
    %1868 = vmatprep.subr.mxu0 0.0
    %1869 = vmatpush1.msra.mxu0 0.0
    %1870 = vmatprep.subr.mxu0 0.0
    %1871 = vmatpush1.msra.mxu0 0.0
    %1872 = vmatprep.subr.mxu0 0.0
    %1873 = vmatpush1.msra.mxu0 0.0
    %1874 = vmatprep.subr.mxu0 0.0
    %1875 = vmatpush1.msra.mxu0 0.0
    %1876 = vmatprep.subr.mxu0 0.0
    %1877 = vmatpush1.msra.mxu0 0.0
    %1878 = vmatprep.subr.mxu0 0.0
    %1879 = vmatpush1.msra.mxu0 0.0
    %1880 = vmatprep.subr.mxu0 0.0
    %1881 = vmatpush1.msra.mxu0 0.0
    %1882 = vmatprep.subr.mxu0 0.0
    %1883 = vmatpush1.msra.mxu0 0.0
    %1884 = vmatprep.subr.mxu0 0.0
    %1885 = vmatpush1.msra.mxu0 0.0
    %1886 = vmatprep.subr.mxu0 0.0
    %1887 = vmatpush1.msra.mxu0 0.0
    %1888 = vmatprep.subr.mxu0 0.0
    %1889 = vmatpush1.msra.mxu0 0.0
    %1890 = vmatprep.subr.mxu0 0.0
    %1891 = vmatpush1.msra.mxu0 0.0
    %1892 = vmatprep.subr.mxu0 0.0
    %1893 = vmatpush1.msra.mxu0 0.0
    %1894 = vmatprep.subr.mxu0 0.0
    %1895 = vmatpush1.msra.mxu0 0.0
    %1896 = vmatprep.subr.mxu0 0.0
    %1897 = vmatpush1.msra.mxu0 0.0
    %1898 = vmatprep.subr.mxu0 0.0
    %1899 = vmatpush1.msra.mxu0 0.0
    %1900 = vmatprep.subr.mxu0 0.0
    %1901 = vmatpush1.msra.mxu0 0.0
    %1902 = vmatprep.subr.mxu0 0.0
    %1903 = vmatpush1.msra.mxu0 0.0
    %1904 = vmatprep.subr.mxu0 0.0
    %1905 = vmatpush1.msra.mxu0 0.0
    %1906 = vmatprep.mubr.f32.mxu0 0.0
    %1907 = vmatmul.mubr.f32.gmra.mrb[0].mxu0 %v1840
    %v1908 = vpop.f32.mrb[0].mxu0
    %v1909 = vadd.f32 0.0, %v1908
    %v1910 = vpop.f32.mrb[0].mxu0
    %1911 = vdwg.mxu0
    %v1912 = vadd.f32 %v1825, %v1909
    %v1913 = vrot.slane %v373, 2
    %v1915 = vrot.slane %v694, 1
    %v1917 = vsel %vm1741, %v1913, %v1915
    %s1918 = scalar_lea.vmem %s7, 128
    %v1919 = vld [vmem:[%s1918] sm:$0xff]
    %v1920 = vld [vmem:[%s1918 + $0x8] sm:$0xff]
    %v1921 = vld [vmem:[%s1918 + $0x10] sm:$0xff]
    %v1922 = vld [vmem:[%s1918 + $0x18] sm:$0xff]
    %v1923 = vld [vmem:[%s1918 + $0x20] sm:$0xff]
    %v1924 = vld [vmem:[%s1918 + $0x28] sm:$0xff]
    %v1925 = vld [vmem:[%s1918 + $0x30] sm:$0xff]
    %v1926 = vld [vmem:[%s1918 + $0x38] sm:$0xff]
    %v1928 = vsel %vm1751, %v1917, 0
    %1930 = vmatprep.subr.mxu0 0.0
    %1931 = vmatpush1.msra.mxu0 %v1919
    %1932 = vmatprep.subr.mxu0 0.0
    %1933 = vmatpush1.msra.mxu0 %v1920
    %1934 = vmatprep.subr.mxu0 0.0
    %1935 = vmatpush1.msra.mxu0 %v1921
    %1936 = vmatprep.subr.mxu0 0.0
    %1937 = vmatpush1.msra.mxu0 %v1922
    %1938 = vmatprep.subr.mxu0 0.0
    %1939 = vmatpush1.msra.mxu0 %v1923
    %1940 = vmatprep.subr.mxu0 0.0
    %1941 = vmatpush1.msra.mxu0 %v1924
    %1942 = vmatprep.subr.mxu0 0.0
    %1943 = vmatpush1.msra.mxu0 %v1925
    %1944 = vmatprep.subr.mxu0 0.0
    %1945 = vmatpush1.msra.mxu0 %v1926
    %1946 = vmatprep.subr.mxu0 0.0
    %1947 = vmatpush1.msra.mxu0 0.0
    %1948 = vmatprep.subr.mxu0 0.0
    %1949 = vmatpush1.msra.mxu0 0.0
    %1950 = vmatprep.subr.mxu0 0.0
    %1951 = vmatpush1.msra.mxu0 0.0
    %1952 = vmatprep.subr.mxu0 0.0
    %1953 = vmatpush1.msra.mxu0 0.0
    %1954 = vmatprep.subr.mxu0 0.0
    %1955 = vmatpush1.msra.mxu0 0.0
    %1956 = vmatprep.subr.mxu0 0.0
    %1957 = vmatpush1.msra.mxu0 0.0
    %1958 = vmatprep.subr.mxu0 0.0
    %1959 = vmatpush1.msra.mxu0 0.0
    %1960 = vmatprep.subr.mxu0 0.0
    %1961 = vmatpush1.msra.mxu0 0.0
    %1962 = vmatprep.subr.mxu0 0.0
    %1963 = vmatpush1.msra.mxu0 0.0
    %1964 = vmatprep.subr.mxu0 0.0
    %1965 = vmatpush1.msra.mxu0 0.0
    %1966 = vmatprep.subr.mxu0 0.0
    %1967 = vmatpush1.msra.mxu0 0.0
    %1968 = vmatprep.subr.mxu0 0.0
    %1969 = vmatpush1.msra.mxu0 0.0
    %1970 = vmatprep.subr.mxu0 0.0
    %1971 = vmatpush1.msra.mxu0 0.0
    %1972 = vmatprep.subr.mxu0 0.0
    %1973 = vmatpush1.msra.mxu0 0.0
    %1974 = vmatprep.subr.mxu0 0.0
    %1975 = vmatpush1.msra.mxu0 0.0
    %1976 = vmatprep.subr.mxu0 0.0
    %1977 = vmatpush1.msra.mxu0 0.0
    %1978 = vmatprep.subr.mxu0 0.0
    %1979 = vmatpush1.msra.mxu0 0.0
    %1980 = vmatprep.subr.mxu0 0.0
    %1981 = vmatpush1.msra.mxu0 0.0
    %1982 = vmatprep.subr.mxu0 0.0
    %1983 = vmatpush1.msra.mxu0 0.0
    %1984 = vmatprep.subr.mxu0 0.0
    %1985 = vmatpush1.msra.mxu0 0.0
    %1986 = vmatprep.subr.mxu0 0.0
    %1987 = vmatpush1.msra.mxu0 0.0
    %1988 = vmatprep.subr.mxu0 0.0
    %1989 = vmatpush1.msra.mxu0 0.0
    %1990 = vmatprep.subr.mxu0 0.0
    %1991 = vmatpush1.msra.mxu0 0.0
    %1992 = vmatprep.subr.mxu0 0.0
    %1993 = vmatpush1.msra.mxu0 0.0
    %1994 = vmatprep.mubr.f32.mxu0 0.0
    %1995 = vmatmul.mubr.f32.gmra.mrb[0].mxu0 %v1928
    %v1996 = vpop.f32.mrb[0].mxu0
    %v1997 = vadd.f32 0.0, %v1996
    %v1998 = vpop.f32.mrb[0].mxu0
    %1999 = vdwg.mxu0
    %v2000 = vadd.f32 %v1912, %v1997
    %v2001 = vrot.slane %v373, 3
    %v2003 = vrot.slane %v694, 2
    %v2005 = vsel %vm1741, %v2001, %v2003
    %s2006 = scalar_lea.vmem %s7, 192
    %v2007 = vld [vmem:[%s2006] sm:$0xff]
    %v2008 = vld [vmem:[%s2006 + $0x8] sm:$0xff]
    %v2009 = vld [vmem:[%s2006 + $0x10] sm:$0xff]
    %v2010 = vld [vmem:[%s2006 + $0x18] sm:$0xff]
    %v2011 = vld [vmem:[%s2006 + $0x20] sm:$0xff]
    %v2012 = vld [vmem:[%s2006 + $0x28] sm:$0xff]
    %v2013 = vld [vmem:[%s2006 + $0x30] sm:$0xff]
    %v2014 = vld [vmem:[%s2006 + $0x38] sm:$0xff]
    %v2016 = vsel %vm1751, %v2005, 0
    %2018 = vmatprep.subr.mxu0 0.0
    %2019 = vmatpush1.msra.mxu0 %v2007
    %2020 = vmatprep.subr.mxu0 0.0
    %2021 = vmatpush1.msra.mxu0 %v2008
    %2022 = vmatprep.subr.mxu0 0.0
    %2023 = vmatpush1.msra.mxu0 %v2009
    %2024 = vmatprep.subr.mxu0 0.0
    %2025 = vmatpush1.msra.mxu0 %v2010
    %2026 = vmatprep.subr.mxu0 0.0
    %2027 = vmatpush1.msra.mxu0 %v2011
    %2028 = vmatprep.subr.mxu0 0.0
    %2029 = vmatpush1.msra.mxu0 %v2012
    %2030 = vmatprep.subr.mxu0 0.0
    %2031 = vmatpush1.msra.mxu0 %v2013
    %2032 = vmatprep.subr.mxu0 0.0
    %2033 = vmatpush1.msra.mxu0 %v2014
    %2034 = vmatprep.subr.mxu0 0.0
    %2035 = vmatpush1.msra.mxu0 0.0
    %2036 = vmatprep.subr.mxu0 0.0
    %2037 = vmatpush1.msra.mxu0 0.0
    %2038 = vmatprep.subr.mxu0 0.0
    %2039 = vmatpush1.msra.mxu0 0.0
    %2040 = vmatprep.subr.mxu0 0.0
    %2041 = vmatpush1.msra.mxu0 0.0
    %2042 = vmatprep.subr.mxu0 0.0
    %2043 = vmatpush1.msra.mxu0 0.0
    %2044 = vmatprep.subr.mxu0 0.0
    %2045 = vmatpush1.msra.mxu0 0.0
    %2046 = vmatprep.subr.mxu0 0.0
    %2047 = vmatpush1.msra.mxu0 0.0
    %2048 = vmatprep.subr.mxu0 0.0
    %2049 = vmatpush1.msra.mxu0 0.0
    %2050 = vmatprep.subr.mxu0 0.0
    %2051 = vmatpush1.msra.mxu0 0.0
    %2052 = vmatprep.subr.mxu0 0.0
    %2053 = vmatpush1.msra.mxu0 0.0
    %2054 = vmatprep.subr.mxu0 0.0
    %2055 = vmatpush1.msra.mxu0 0.0
    %2056 = vmatprep.subr.mxu0 0.0
    %2057 = vmatpush1.msra.mxu0 0.0
    %2058 = vmatprep.subr.mxu0 0.0
    %2059 = vmatpush1.msra.mxu0 0.0
    %2060 = vmatprep.subr.mxu0 0.0
    %2061 = vmatpush1.msra.mxu0 0.0
    %2062 = vmatprep.subr.mxu0 0.0
    %2063 = vmatpush1.msra.mxu0 0.0
    %2064 = vmatprep.subr.mxu0 0.0
    %2065 = vmatpush1.msra.mxu0 0.0
    %2066 = vmatprep.subr.mxu0 0.0
    %2067 = vmatpush1.msra.mxu0 0.0
    %2068 = vmatprep.subr.mxu0 0.0
    %2069 = vmatpush1.msra.mxu0 0.0
    %2070 = vmatprep.subr.mxu0 0.0
    %2071 = vmatpush1.msra.mxu0 0.0
    %2072 = vmatprep.subr.mxu0 0.0
    %2073 = vmatpush1.msra.mxu0 0.0
    %2074 = vmatprep.subr.mxu0 0.0
    %2075 = vmatpush1.msra.mxu0 0.0
    %2076 = vmatprep.subr.mxu0 0.0
    %2077 = vmatpush1.msra.mxu0 0.0
    %2078 = vmatprep.subr.mxu0 0.0
    %2079 = vmatpush1.msra.mxu0 0.0
    %2080 = vmatprep.subr.mxu0 0.0
    %2081 = vmatpush1.msra.mxu0 0.0
    %2082 = vmatprep.mubr.f32.mxu0 0.0
    %2083 = vmatmul.mubr.f32.gmra.mrb[0].mxu0 %v2016
    %v2084 = vpop.f32.mrb[0].mxu0
    %v2085 = vadd.f32 0.0, %v2084
    %v2086 = vpop.f32.mrb[0].mxu0
    %2087 = vdwg.mxu0
    %v2088 = vadd.f32 %v2000, %v2085
    %v2089 = vrot.slane %v373, 4
    %v2091 = vrot.slane %v694, 3
    %v2093 = vsel %vm1741, %v2089, %v2091
    %s2094 = scalar_lea.vmem %s7, 256
    %v2095 = vld [vmem:[%s2094] sm:$0xff]
    %v2096 = vld [vmem:[%s2094 + $0x8] sm:$0xff]
    %v2097 = vld [vmem:[%s2094 + $0x10] sm:$0xff]
    %v2098 = vld [vmem:[%s2094 + $0x18] sm:$0xff]
    %v2099 = vld [vmem:[%s2094 + $0x20] sm:$0xff]
    %v2100 = vld [vmem:[%s2094 + $0x28] sm:$0xff]
    %v2101 = vld [vmem:[%s2094 + $0x30] sm:$0xff]
    %v2102 = vld [vmem:[%s2094 + $0x38] sm:$0xff]
    %v2104 = vsel %vm1751, %v2093, 0
    %2106 = vmatprep.subr.mxu0 0.0
    %2107 = vmatpush1.msra.mxu0 %v2095
    %2108 = vmatprep.subr.mxu0 0.0
    %2109 = vmatpush1.msra.mxu0 %v2096
    %2110 = vmatprep.subr.mxu0 0.0
    %2111 = vmatpush1.msra.mxu0 %v2097
    %2112 = vmatprep.subr.mxu0 0.0
    %2113 = vmatpush1.msra.mxu0 %v2098
    %2114 = vmatprep.subr.mxu0 0.0
    %2115 = vmatpush1.msra.mxu0 %v2099
    %2116 = vmatprep.subr.mxu0 0.0
    %2117 = vmatpush1.msra.mxu0 %v2100
    %2118 = vmatprep.subr.mxu0 0.0
    %2119 = vmatpush1.msra.mxu0 %v2101
    %2120 = vmatprep.subr.mxu0 0.0
    %2121 = vmatpush1.msra.mxu0 %v2102
    %2122 = vmatprep.subr.mxu0 0.0
    %2123 = vmatpush1.msra.mxu0 0.0
    %2124 = vmatprep.subr.mxu0 0.0
    %2125 = vmatpush1.msra.mxu0 0.0
    %2126 = vmatprep.subr.mxu0 0.0
    %2127 = vmatpush1.msra.mxu0 0.0
    %2128 = vmatprep.subr.mxu0 0.0
    %2129 = vmatpush1.msra.mxu0 0.0
    %2130 = vmatprep.subr.mxu0 0.0
    %2131 = vmatpush1.msra.mxu0 0.0
    %2132 = vmatprep.subr.mxu0 0.0
    %2133 = vmatpush1.msra.mxu0 0.0
    %2134 = vmatprep.subr.mxu0 0.0
    %2135 = vmatpush1.msra.mxu0 0.0
    %2136 = vmatprep.subr.mxu0 0.0
    %2137 = vmatpush1.msra.mxu0 0.0
    %2138 = vmatprep.subr.mxu0 0.0
    %2139 = vmatpush1.msra.mxu0 0.0
    %2140 = vmatprep.subr.mxu0 0.0
    %2141 = vmatpush1.msra.mxu0 0.0
    %2142 = vmatprep.subr.mxu0 0.0
    %2143 = vmatpush1.msra.mxu0 0.0
    %2144 = vmatprep.subr.mxu0 0.0
    %2145 = vmatpush1.msra.mxu0 0.0
    %2146 = vmatprep.subr.mxu0 0.0
    %2147 = vmatpush1.msra.mxu0 0.0
    %2148 = vmatprep.subr.mxu0 0.0
    %2149 = vmatpush1.msra.mxu0 0.0
    %2150 = vmatprep.subr.mxu0 0.0
    %2151 = vmatpush1.msra.mxu0 0.0
    %2152 = vmatprep.subr.mxu0 0.0
    %2153 = vmatpush1.msra.mxu0 0.0
    %2154 = vmatprep.subr.mxu0 0.0
    %2155 = vmatpush1.msra.mxu0 0.0
    %2156 = vmatprep.subr.mxu0 0.0
    %2157 = vmatpush1.msra.mxu0 0.0
    %2158 = vmatprep.subr.mxu0 0.0
    %2159 = vmatpush1.msra.mxu0 0.0
    %2160 = vmatprep.subr.mxu0 0.0
    %2161 = vmatpush1.msra.mxu0 0.0
    %2162 = vmatprep.subr.mxu0 0.0
    %2163 = vmatpush1.msra.mxu0 0.0
    %2164 = vmatprep.subr.mxu0 0.0
    %2165 = vmatpush1.msra.mxu0 0.0
    %2166 = vmatprep.subr.mxu0 0.0
    %2167 = vmatpush1.msra.mxu0 0.0
    %2168 = vmatprep.subr.mxu0 0.0
    %2169 = vmatpush1.msra.mxu0 0.0
    %2170 = vmatprep.mubr.f32.mxu0 0.0
    %2171 = vmatmul.mubr.f32.gmra.mrb[0].mxu0 %v2104
    %v2172 = vpop.f32.mrb[0].mxu0
    %v2173 = vadd.f32 0.0, %v2172
    %v2174 = vpop.f32.mrb[0].mxu0
    %2175 = vdwg.mxu0
    %v2176 = vadd.f32 %v2088, %v2173
    %v2177 = vrot.slane %v373, 5
    %v2179 = vrot.slane %v694, 4
    %v2181 = vsel %vm1741, %v2177, %v2179
    %s2182 = scalar_lea.vmem %s7, 320
    %v2183 = vld [vmem:[%s2182] sm:$0xff]
    %v2184 = vld [vmem:[%s2182 + $0x8] sm:$0xff]
    %v2185 = vld [vmem:[%s2182 + $0x10] sm:$0xff]
    %v2186 = vld [vmem:[%s2182 + $0x18] sm:$0xff]
    %v2187 = vld [vmem:[%s2182 + $0x20] sm:$0xff]
    %v2188 = vld [vmem:[%s2182 + $0x28] sm:$0xff]
    %v2189 = vld [vmem:[%s2182 + $0x30] sm:$0xff]
    %v2190 = vld [vmem:[%s2182 + $0x38] sm:$0xff]
    %v2192 = vsel %vm1751, %v2181, 0
    %2194 = vmatprep.subr.mxu0 0.0
    %2195 = vmatpush1.msra.mxu0 %v2183
    %2196 = vmatprep.subr.mxu0 0.0
    %2197 = vmatpush1.msra.mxu0 %v2184
    %2198 = vmatprep.subr.mxu0 0.0
    %2199 = vmatpush1.msra.mxu0 %v2185
    %2200 = vmatprep.subr.mxu0 0.0
    %2201 = vmatpush1.msra.mxu0 %v2186
    %2202 = vmatprep.subr.mxu0 0.0
    %2203 = vmatpush1.msra.mxu0 %v2187
    %2204 = vmatprep.subr.mxu0 0.0
    %2205 = vmatpush1.msra.mxu0 %v2188
    %2206 = vmatprep.subr.mxu0 0.0
    %2207 = vmatpush1.msra.mxu0 %v2189
    %2208 = vmatprep.subr.mxu0 0.0
    %2209 = vmatpush1.msra.mxu0 %v2190
    %2210 = vmatprep.subr.mxu0 0.0
    %2211 = vmatpush1.msra.mxu0 0.0
    %2212 = vmatprep.subr.mxu0 0.0
    %2213 = vmatpush1.msra.mxu0 0.0
    %2214 = vmatprep.subr.mxu0 0.0
    %2215 = vmatpush1.msra.mxu0 0.0
    %2216 = vmatprep.subr.mxu0 0.0
    %2217 = vmatpush1.msra.mxu0 0.0
    %2218 = vmatprep.subr.mxu0 0.0
    %2219 = vmatpush1.msra.mxu0 0.0
    %2220 = vmatprep.subr.mxu0 0.0
    %2221 = vmatpush1.msra.mxu0 0.0
    %2222 = vmatprep.subr.mxu0 0.0
    %2223 = vmatpush1.msra.mxu0 0.0
    %2224 = vmatprep.subr.mxu0 0.0
    %2225 = vmatpush1.msra.mxu0 0.0
    %2226 = vmatprep.subr.mxu0 0.0
    %2227 = vmatpush1.msra.mxu0 0.0
    %2228 = vmatprep.subr.mxu0 0.0
    %2229 = vmatpush1.msra.mxu0 0.0
    %2230 = vmatprep.subr.mxu0 0.0
    %2231 = vmatpush1.msra.mxu0 0.0
    %2232 = vmatprep.subr.mxu0 0.0
    %2233 = vmatpush1.msra.mxu0 0.0
    %2234 = vmatprep.subr.mxu0 0.0
    %2235 = vmatpush1.msra.mxu0 0.0
    %2236 = vmatprep.subr.mxu0 0.0
    %2237 = vmatpush1.msra.mxu0 0.0
    %2238 = vmatprep.subr.mxu0 0.0
    %2239 = vmatpush1.msra.mxu0 0.0
    %2240 = vmatprep.subr.mxu0 0.0
    %2241 = vmatpush1.msra.mxu0 0.0
    %2242 = vmatprep.subr.mxu0 0.0
    %2243 = vmatpush1.msra.mxu0 0.0
    %2244 = vmatprep.subr.mxu0 0.0
    %2245 = vmatpush1.msra.mxu0 0.0
    %2246 = vmatprep.subr.mxu0 0.0
    %2247 = vmatpush1.msra.mxu0 0.0
    %2248 = vmatprep.subr.mxu0 0.0
    %2249 = vmatpush1.msra.mxu0 0.0
    %2250 = vmatprep.subr.mxu0 0.0
    %2251 = vmatpush1.msra.mxu0 0.0
    %2252 = vmatprep.subr.mxu0 0.0
    %2253 = vmatpush1.msra.mxu0 0.0
    %2254 = vmatprep.subr.mxu0 0.0
    %2255 = vmatpush1.msra.mxu0 0.0
    %2256 = vmatprep.subr.mxu0 0.0
    %2257 = vmatpush1.msra.mxu0 0.0
    %2258 = vmatprep.mubr.f32.mxu0 0.0
    %2259 = vmatmul.mubr.f32.gmra.mrb[0].mxu0 %v2192
    %v2260 = vpop.f32.mrb[0].mxu0
    %v2261 = vadd.f32 0.0, %v2260
    %v2262 = vpop.f32.mrb[0].mxu0
    %2263 = vdwg.mxu0
    %v2264 = vadd.f32 %v2176, %v2261
    %v2265 = vrot.slane %v373, 6
    %v2267 = vrot.slane %v694, 5
    %v2269 = vsel %vm1741, %v2265, %v2267
    %s2270 = scalar_lea.vmem %s7, 384
    %v2271 = vld [vmem:[%s2270] sm:$0xff]
    %v2272 = vld [vmem:[%s2270 + $0x8] sm:$0xff]
    %v2273 = vld [vmem:[%s2270 + $0x10] sm:$0xff]
    %v2274 = vld [vmem:[%s2270 + $0x18] sm:$0xff]
    %v2275 = vld [vmem:[%s2270 + $0x20] sm:$0xff]
    %v2276 = vld [vmem:[%s2270 + $0x28] sm:$0xff]
    %v2277 = vld [vmem:[%s2270 + $0x30] sm:$0xff]
    %v2278 = vld [vmem:[%s2270 + $0x38] sm:$0xff]
    %v2280 = vsel %vm1751, %v2269, 0
    %2282 = vmatprep.subr.mxu0 0.0
    %2283 = vmatpush1.msra.mxu0 %v2271
    %2284 = vmatprep.subr.mxu0 0.0
    %2285 = vmatpush1.msra.mxu0 %v2272
    %2286 = vmatprep.subr.mxu0 0.0
    %2287 = vmatpush1.msra.mxu0 %v2273
    %2288 = vmatprep.subr.mxu0 0.0
    %2289 = vmatpush1.msra.mxu0 %v2274
    %2290 = vmatprep.subr.mxu0 0.0
    %2291 = vmatpush1.msra.mxu0 %v2275
    %2292 = vmatprep.subr.mxu0 0.0
    %2293 = vmatpush1.msra.mxu0 %v2276
    %2294 = vmatprep.subr.mxu0 0.0
    %2295 = vmatpush1.msra.mxu0 %v2277
    %2296 = vmatprep.subr.mxu0 0.0
    %2297 = vmatpush1.msra.mxu0 %v2278
    %2298 = vmatprep.subr.mxu0 0.0
    %2299 = vmatpush1.msra.mxu0 0.0
    %2300 = vmatprep.subr.mxu0 0.0
    %2301 = vmatpush1.msra.mxu0 0.0
    %2302 = vmatprep.subr.mxu0 0.0
    %2303 = vmatpush1.msra.mxu0 0.0
    %2304 = vmatprep.subr.mxu0 0.0
    %2305 = vmatpush1.msra.mxu0 0.0
    %2306 = vmatprep.subr.mxu0 0.0
    %2307 = vmatpush1.msra.mxu0 0.0
    %2308 = vmatprep.subr.mxu0 0.0
    %2309 = vmatpush1.msra.mxu0 0.0
    %2310 = vmatprep.subr.mxu0 0.0
    %2311 = vmatpush1.msra.mxu0 0.0
    %2312 = vmatprep.subr.mxu0 0.0
    %2313 = vmatpush1.msra.mxu0 0.0
    %2314 = vmatprep.subr.mxu0 0.0
    %2315 = vmatpush1.msra.mxu0 0.0
    %2316 = vmatprep.subr.mxu0 0.0
    %2317 = vmatpush1.msra.mxu0 0.0
    %2318 = vmatprep.subr.mxu0 0.0
    %2319 = vmatpush1.msra.mxu0 0.0
    %2320 = vmatprep.subr.mxu0 0.0
    %2321 = vmatpush1.msra.mxu0 0.0
    %2322 = vmatprep.subr.mxu0 0.0
    %2323 = vmatpush1.msra.mxu0 0.0
    %2324 = vmatprep.subr.mxu0 0.0
    %2325 = vmatpush1.msra.mxu0 0.0
    %2326 = vmatprep.subr.mxu0 0.0
    %2327 = vmatpush1.msra.mxu0 0.0
    %2328 = vmatprep.subr.mxu0 0.0
    %2329 = vmatpush1.msra.mxu0 0.0
    %2330 = vmatprep.subr.mxu0 0.0
    %2331 = vmatpush1.msra.mxu0 0.0
    %2332 = vmatprep.subr.mxu0 0.0
    %2333 = vmatpush1.msra.mxu0 0.0
    %2334 = vmatprep.subr.mxu0 0.0
    %2335 = vmatpush1.msra.mxu0 0.0
    %2336 = vmatprep.subr.mxu0 0.0
    %2337 = vmatpush1.msra.mxu0 0.0
    %2338 = vmatprep.subr.mxu0 0.0
    %2339 = vmatpush1.msra.mxu0 0.0
    %2340 = vmatprep.subr.mxu0 0.0
    %2341 = vmatpush1.msra.mxu0 0.0
    %2342 = vmatprep.subr.mxu0 0.0
    %2343 = vmatpush1.msra.mxu0 0.0
    %2344 = vmatprep.subr.mxu0 0.0
    %2345 = vmatpush1.msra.mxu0 0.0
    %2346 = vmatprep.mubr.f32.mxu0 0.0
    %2347 = vmatmul.mubr.f32.gmra.mrb[0].mxu0 %v2280
    %v2348 = vpop.f32.mrb[0].mxu0
    %v2349 = vadd.f32 0.0, %v2348
    %v2350 = vpop.f32.mrb[0].mxu0
    %2351 = vdwg.mxu0
    %v2352 = vadd.f32 %v2264, %v2349
    %v2353 = vrot.slane %v373, 7
    %v2355 = vrot.slane %v694, 6
    %v2357 = vsel %vm1741, %v2353, %v2355
    %s2358 = scalar_lea.vmem %s7, 448
    %v2359 = vld [vmem:[%s2358] sm:$0xff]
    %v2360 = vld [vmem:[%s2358 + $0x8] sm:$0xff]
    %v2361 = vld [vmem:[%s2358 + $0x10] sm:$0xff]
    %v2362 = vld [vmem:[%s2358 + $0x18] sm:$0xff]
    %v2363 = vld [vmem:[%s2358 + $0x20] sm:$0xff]
    %v2364 = vld [vmem:[%s2358 + $0x28] sm:$0xff]
    %v2365 = vld [vmem:[%s2358 + $0x30] sm:$0xff]
    %v2366 = vld [vmem:[%s2358 + $0x38] sm:$0xff]
    %v2368 = vsel %vm1751, %v2357, 0
    %2370 = vmatprep.subr.mxu0 0.0
    %2371 = vmatpush1.msra.mxu0 %v2359
    %2372 = vmatprep.subr.mxu0 0.0
    %2373 = vmatpush1.msra.mxu0 %v2360
    %2374 = vmatprep.subr.mxu0 0.0
    %2375 = vmatpush1.msra.mxu0 %v2361
    %2376 = vmatprep.subr.mxu0 0.0
    %2377 = vmatpush1.msra.mxu0 %v2362
    %2378 = vmatprep.subr.mxu0 0.0
    %2379 = vmatpush1.msra.mxu0 %v2363
    %2380 = vmatprep.subr.mxu0 0.0
    %2381 = vmatpush1.msra.mxu0 %v2364
    %2382 = vmatprep.subr.mxu0 0.0
    %2383 = vmatpush1.msra.mxu0 %v2365
    %2384 = vmatprep.subr.mxu0 0.0
    %2385 = vmatpush1.msra.mxu0 %v2366
    %2386 = vmatprep.subr.mxu0 0.0
    %2387 = vmatpush1.msra.mxu0 0.0
    %2388 = vmatprep.subr.mxu0 0.0
    %2389 = vmatpush1.msra.mxu0 0.0
    %2390 = vmatprep.subr.mxu0 0.0
    %2391 = vmatpush1.msra.mxu0 0.0
    %2392 = vmatprep.subr.mxu0 0.0
    %2393 = vmatpush1.msra.mxu0 0.0
    %2394 = vmatprep.subr.mxu0 0.0
    %2395 = vmatpush1.msra.mxu0 0.0
    %2396 = vmatprep.subr.mxu0 0.0
    %2397 = vmatpush1.msra.mxu0 0.0
    %2398 = vmatprep.subr.mxu0 0.0
    %2399 = vmatpush1.msra.mxu0 0.0
    %2400 = vmatprep.subr.mxu0 0.0
    %2401 = vmatpush1.msra.mxu0 0.0
    %2402 = vmatprep.subr.mxu0 0.0
    %2403 = vmatpush1.msra.mxu0 0.0
    %2404 = vmatprep.subr.mxu0 0.0
    %2405 = vmatpush1.msra.mxu0 0.0
    %2406 = vmatprep.subr.mxu0 0.0
    %2407 = vmatpush1.msra.mxu0 0.0
    %2408 = vmatprep.subr.mxu0 0.0
    %2409 = vmatpush1.msra.mxu0 0.0
    %2410 = vmatprep.subr.mxu0 0.0
    %2411 = vmatpush1.msra.mxu0 0.0
    %2412 = vmatprep.subr.mxu0 0.0
    %2413 = vmatpush1.msra.mxu0 0.0
    %2414 = vmatprep.subr.mxu0 0.0
    %2415 = vmatpush1.msra.mxu0 0.0
    %2416 = vmatprep.subr.mxu0 0.0
    %2417 = vmatpush1.msra.mxu0 0.0
    %2418 = vmatprep.subr.mxu0 0.0
    %2419 = vmatpush1.msra.mxu0 0.0
    %2420 = vmatprep.subr.mxu0 0.0
    %2421 = vmatpush1.msra.mxu0 0.0
    %2422 = vmatprep.subr.mxu0 0.0
    %2423 = vmatpush1.msra.mxu0 0.0
    %2424 = vmatprep.subr.mxu0 0.0
    %2425 = vmatpush1.msra.mxu0 0.0
    %2426 = vmatprep.subr.mxu0 0.0
    %2427 = vmatpush1.msra.mxu0 0.0
    %2428 = vmatprep.subr.mxu0 0.0
    %2429 = vmatpush1.msra.mxu0 0.0
    %2430 = vmatprep.subr.mxu0 0.0
    %2431 = vmatpush1.msra.mxu0 0.0
    %2432 = vmatprep.subr.mxu0 0.0
    %2433 = vmatpush1.msra.mxu0 0.0
    %2434 = vmatprep.mubr.f32.mxu0 0.0
    %2435 = vmatmul.mubr.f32.gmra.mrb[0].mxu0 %v2368
    %v2436 = vpop.f32.mrb[0].mxu0
    %v2437 = vadd.f32 0.0, %v2436
    %v2438 = vpop.f32.mrb[0].mxu0
    %2439 = vdwg.mxu0
    %v2440 = vadd.f32 %v2352, %v2437
    %v2441 = vmax.f32 %v2440, 0.0
    %v2442 = vld [vmem:[%s10] sm:$0xff]
    %v2443 = vld [vmem:[%s10 + $0x8] sm:$0xff]
    %v2444 = vld [vmem:[%s10 + $0x10] sm:$0xff]
    %v2445 = vld [vmem:[%s10 + $0x18] sm:$0xff]
    %v2446 = vld [vmem:[%s10 + $0x20] sm:$0xff]
    %v2447 = vld [vmem:[%s10 + $0x28] sm:$0xff]
    %v2448 = vld [vmem:[%s10 + $0x30] sm:$0xff]
    %v2449 = vld [vmem:[%s10 + $0x38] sm:$0xff]
    %v2450 = vld [vmem:[%s10 + $0x40] sm:$0xff]
    %v2451 = vld [vmem:[%s10 + $0x48] sm:$0xff]
    %v2452 = vld [vmem:[%s10 + $0x50] sm:$0xff]
    %v2453 = vld [vmem:[%s10 + $0x58] sm:$0xff]
    %v2454 = vld [vmem:[%s10 + $0x60] sm:$0xff]
    %v2455 = vld [vmem:[%s10 + $0x68] sm:$0xff]
    %v2456 = vld [vmem:[%s10 + $0x70] sm:$0xff]
    %v2457 = vld [vmem:[%s10 + $0x78] sm:$0xff]
    %v2458 = vld [vmem:[%s11] sm:$0x1]
    %v2460 = vlaneseq
    %v2461 = vshrl.u32 %v2460, 7
    %v2462 = vsub.s32 0, %v2461
    %v2463 = vrot.slane %v2458, %v2462
    %2465 = vmatprep.subr.mxu0 0.0
    %2466 = vmatpush1.msra.mxu0 %v2442
    %2467 = vmatprep.subr.mxu0 0.0
    %2468 = vmatpush1.msra.mxu0 %v2443
    %2469 = vmatprep.subr.mxu0 0.0
    %2470 = vmatpush1.msra.mxu0 %v2444
    %2471 = vmatprep.subr.mxu0 0.0
    %2472 = vmatpush1.msra.mxu0 %v2445
    %2473 = vmatprep.subr.mxu0 0.0
    %2474 = vmatpush1.msra.mxu0 %v2446
    %2475 = vmatprep.subr.mxu0 0.0
    %2476 = vmatpush1.msra.mxu0 %v2447
    %2477 = vmatprep.subr.mxu0 0.0
    %2478 = vmatpush1.msra.mxu0 %v2448
    %2479 = vmatprep.subr.mxu0 0.0
    %2480 = vmatpush1.msra.mxu0 %v2449
    %2481 = vmatprep.subr.mxu0 0.0
    %2482 = vmatpush1.msra.mxu0 %v2450
    %2483 = vmatprep.subr.mxu0 0.0
    %2484 = vmatpush1.msra.mxu0 %v2451
    %2485 = vmatprep.subr.mxu0 0.0
    %2486 = vmatpush1.msra.mxu0 %v2452
    %2487 = vmatprep.subr.mxu0 0.0
    %2488 = vmatpush1.msra.mxu0 %v2453
    %2489 = vmatprep.subr.mxu0 0.0
    %2490 = vmatpush1.msra.mxu0 %v2454
    %2491 = vmatprep.subr.mxu0 0.0
    %2492 = vmatpush1.msra.mxu0 %v2455
    %2493 = vmatprep.subr.mxu0 0.0
    %2494 = vmatpush1.msra.mxu0 %v2456
    %2495 = vmatprep.subr.mxu0 0.0
    %2496 = vmatpush1.msra.mxu0 %v2457
    %2497 = vmatprep.subr.mxu0 0.0
    %2498 = vmatpush1.msra.mxu0 0.0
    %2499 = vmatprep.subr.mxu0 0.0
    %2500 = vmatpush1.msra.mxu0 0.0
    %2501 = vmatprep.subr.mxu0 0.0
    %2502 = vmatpush1.msra.mxu0 0.0
    %2503 = vmatprep.subr.mxu0 0.0
    %2504 = vmatpush1.msra.mxu0 0.0
    %2505 = vmatprep.subr.mxu0 0.0
    %2506 = vmatpush1.msra.mxu0 0.0
    %2507 = vmatprep.subr.mxu0 0.0
    %2508 = vmatpush1.msra.mxu0 0.0
    %2509 = vmatprep.subr.mxu0 0.0
    %2510 = vmatpush1.msra.mxu0 0.0
    %2511 = vmatprep.subr.mxu0 0.0
    %2512 = vmatpush1.msra.mxu0 0.0
    %2513 = vmatprep.subr.mxu0 0.0
    %2514 = vmatpush1.msra.mxu0 0.0
    %2515 = vmatprep.subr.mxu0 0.0
    %2516 = vmatpush1.msra.mxu0 0.0
    %2517 = vmatprep.subr.mxu0 0.0
    %2518 = vmatpush1.msra.mxu0 0.0
    %2519 = vmatprep.subr.mxu0 0.0
    %2520 = vmatpush1.msra.mxu0 0.0
    %2521 = vmatprep.subr.mxu0 0.0
    %2522 = vmatpush1.msra.mxu0 0.0
    %2523 = vmatprep.subr.mxu0 0.0
    %2524 = vmatpush1.msra.mxu0 0.0
    %2525 = vmatprep.subr.mxu0 0.0
    %2526 = vmatpush1.msra.mxu0 0.0
    %2527 = vmatprep.subr.mxu0 0.0
    %2528 = vmatpush1.msra.mxu0 0.0
    %2529 = vmatprep.mubr.f32.mxu0 0.0
    %2530 = vmatmul.mubr.f32.gmra.mrb[0].mxu0 %v2441
    %v2531 = vpop.f32.mrb[0].mxu0
    %v2532 = vadd.f32 %v2463, %v2531
    %v2533 = vpop.f32.mrb[0].mxu0
    %2534 = vdwg.mxu0
    %vm2535 = vcmask 58368
    %2536 = vst.msk [vmem:[#allocation2] sm:$0x3] %vm2535, %v2532
    // Predicated region
    $region50: #{hybrid_forward.1} parent=1 // pred_check
      _
    $region51: #{hybrid_forward.1} parent=1 // pred_check_branch
      %2538 = sbr.rel (0) target = $region53
    $region52: #{hybrid_forward.1} parent=1 // pred_region
      %s2540 = ssub.s32 32, 32
      %2541 = vsyncadd [#allocation3], %s2540
      %s2543 = sshll.u32 [#allocation2], 4
      %s2544 = int_to_ptr.vmem [resolvable:$true] %s2543
      %2546 = dma.vmem_to_hbm [thread:$0]  %s2544, 32, %s12, [#allocation3]
    $region53: #{hybrid_forward.1} parent=1 // pred_fallthru
      _
    // Predicated region
    $region54: #{hybrid_forward.1} parent=1 // pred_check
      _
    $region55: #{hybrid_forward.1} parent=1 // pred_check_branch
      %2548 = sbr.rel (0) target = $region57
    $region56: #{hybrid_forward.1} parent=1 // pred_region
      %2549 = dma.done [#allocation3], 32
    $region57: #{hybrid_forward.1} parent=1 // pred_fallthru
      _
    %2550 = vsyncpa [#allocation3], 1

</llo_original>
